<compile_context>
chip_gen: v6e
topology: v6e:2x2x1
jax: 0.10.0
libtpu: 0.0.40
codegen_flags: <defaults>
</compile_context>

<pallas_src>
import functools

import jax
import jax.numpy as jnp
from jax import lax
from jax.experimental import pallas as pl
from jax.experimental.pallas import tpu as pltpu


_MIN_PALLAS_ELEMS = 1024  # below this, jnp.take beats kernel launch overhead


def _round_up(x, m):
    return ((x + m - 1) // m) * m


def _pick_c_tile(B, C, n_pad, itemsize):
    """Largest 128-multiple C tile whose honest VMEM footprint fits the budget."""
    if C < 128:
        return C  # full-dim block is allowed
    budget = 14 << 20  # leaves 2x headroom inside a 32 MiB scoped limit (v7x-safe)
    for cand in (1024, 512, 256, 128):
        if C < cand:
            continue
        est = (2 * B * cand * itemsize      # double-buffered samples blocks
               + 3 * cand * n_pad * 4       # iota + compare + one-hot temporaries
               + B * n_pad * 4              # f32 accumulator scratch
               + 2 * B * n_pad * itemsize   # output block (+ writeback copy)
               + n_pad * 4)                 # resident index row
        if est <= budget:
            return cand
    return 128


def _gather_kernel(blocks_ref, counts_ref, ind_ref, x_ref, out_ref, acc_ref,
                   *, c_total, ragged):
    """One active C-block of the one-hot gather matmul.

    blocks_ref: (P, n_steps) int32 SMEM  — C-block id processed at (p, s).
    counts_ref: (P,)         int32 SMEM  — number of genuinely active steps per slice.
    ind_ref:    (1, n_pad)   int32 VMEM  — column indices (padded with -1 sentinel).
    x_ref:      (B, c_tile)  VMEM        — samples block (native [B, C] layout).
    out_ref:    (B, n_pad)   VMEM        — per-slice partial output block.
    acc_ref:    (B, n_pad)   f32 VMEM    — accumulator scratch.
    """
    p = pl.program_id(0)   # parallel slice (megacore axis)
    s = pl.program_id(1)   # step within slice (reduction over active C blocks)
    c_tile = x_ref.shape[1]
    n_pad = ind_ref.shape[1]

    @pl.when(s == 0)
    def _init():
        acc_ref[...] = jnp.zeros_like(acc_ref)

    @pl.when(s < counts_ref[p])          # skip padded schedule slots entirely
    def _compute():
        c0 = blocks_ref[p, s] * c_tile
        x = x_ref[...]
        if ragged:
            # Only traced when C % c_tile != 0: zero the columns of a partial
            # edge block (they hold unspecified padding; keep NaN/Inf out).
            col = lax.broadcasted_iota(jnp.int32, x.shape, 1)
            x = jnp.where(col < (c_total - c0), x, 0).astype(x_ref.dtype)

        # One-hot selector: shift the (small) index row instead of the big iota.
        ind_local = ind_ref[...] - c0                                   # (1, n_pad)
        row_ids = lax.broadcasted_iota(jnp.int32, (c_tile, n_pad), 0)   # (c_tile, n_pad)
        onehot = (row_ids == ind_local).astype(x.dtype)

        acc_ref[...] += jnp.dot(x, onehot, preferred_element_type=jnp.float32)

    @pl.when(s == pl.num_programs(1) - 1)
    def _store():
        out_ref[...] = acc_ref[...].astype(out_ref.dtype)


def gather_columns(samples, ind):
    """Pallas kernel computing samples[:, ind].

    samples: [B, C] array.
    ind:     [num]  integer indices into axis 1 (any order; duplicates allowed).
    returns: [B, num]
    """
    B, C = samples.shape
    num = int(ind.shape[0])

    # Clamp indices (cheap safety; matches in-bounds gather semantics).
    ind = jnp.clip(ind.astype(jnp.int32), 0, C - 1)

    # Pad num up to a lane-dense multiple of 128; sentinel -1 never matches.
    n_pad = _round_up(max(num, 1), 128)
    ind_padded = jnp.full((1, n_pad), -1, dtype=jnp.int32).at[0, :num].set(ind)

    itemsize = jnp.dtype(samples.dtype).itemsize
    c_tile = _pick_c_tile(B, C, n_pad, itemsize)
    n_blocks = -(-C // c_tile)
    ragged = (C % c_tile) != 0

    # Upper bound on the number of distinct C blocks touched by ind.
    n_steps_total = min(num, n_blocks)
    # 2-way parallel split so v7x megacore has a >=2-wide parallel axis.
    P = 2 if n_steps_total >= 2 else 1
    n_steps = -(-n_steps_total // P)

    # --- active-block schedule (plain-JAX glue, all shapes static) -----------
    blk = jnp.sort(ind) // c_tile                      # touched blocks, grouped
    is_new = jnp.concatenate(
        [jnp.ones((1,), dtype=bool), blk[1:] != blk[:-1]])
    slot = jnp.cumsum(is_new.astype(jnp.int32)) - 1    # slot of each block in list
    n_active = jnp.sum(is_new.astype(jnp.int32))       # distinct blocks touched
    flat = jnp.full((P * n_steps,), blk[-1], dtype=jnp.int32)  # pad = last block
    flat = flat.at[jnp.minimum(slot, P * n_steps - 1)].set(blk)
    active_blocks = flat.reshape(P, n_steps)
    counts = jnp.clip(n_active - jnp.arange(P, dtype=jnp.int32) * n_steps,
                      0, n_steps).astype(jnp.int32)

    # Honest VMEM accounting + explicit limit (capped for v7x's 64 MiB VMEM).
    vmem_est = (2 * B * c_tile * itemsize + 3 * c_tile * n_pad * 4
                + B * n_pad * 4 + 2 * B * n_pad * itemsize + n_pad * 4)
    vmem_limit = int(min(32 << 20, max(16 << 20, 2 * vmem_est)))

    out_wide = pl.pallas_call(
        functools.partial(_gather_kernel, c_total=C, ragged=ragged),
        out_shape=jax.ShapeDtypeStruct((B, P * n_pad), samples.dtype),
        grid_spec=pltpu.PrefetchScalarGridSpec(
            num_scalar_prefetch=2,
            grid=(P, n_steps),
            in_specs=[
                # indices: single resident block
                pl.BlockSpec((1, n_pad), lambda p, s, blocks, counts: (0, 0)),
                # samples: data-dependent block — only touched C blocks are fetched
                pl.BlockSpec((B, c_tile),
                             lambda p, s, blocks, counts: (0, blocks[p, s])),
            ],
            out_specs=pl.BlockSpec((B, n_pad),
                                   lambda p, s, blocks, counts: (0, p)),
            scratch_shapes=[pltpu.VMEM((B, n_pad), jnp.float32)],
        ),
        compiler_params=pltpu.CompilerParams(
            dimension_semantics=("parallel", "arbitrary"),
            vmem_limit_bytes=vmem_limit),
    )(active_blocks, counts, ind_padded, samples)

    if P > 1:
        # Disjoint block sets per slice -> exactly one slice contributes per
        # column; summing the partials is exact (the other is 0).
        out = out_wide.reshape(B, P, n_pad).sum(axis=1)
    else:
        out = out_wide
    return out[:, :num]


class Sampler:
    """JAX/Pallas port of the PyTorch Sampler module."""

    def __init__(self, num, actor, rate=0.005):
        self.num = num
        self.actor = actor
        self.rate = rate

    def __call__(self, samples, key):
        assert samples.shape[1] >= self.num
        C = samples.shape[1]
        if self.actor == 'random':
            ind = jnp.sort(jax.random.permutation(key, C)[:self.num])
        elif self.actor in ('exp', 'zipfs'):
            # zipfs branch in the reference also dispatches to exp_sample.
            probs = self.rate * jnp.exp(
                -self.rate * jnp.arange(C, dtype=jnp.float32))
            probs = probs / probs.sum()  # torch.multinomial normalizes internally
            ind = jnp.sort(
                jax.random.choice(key, C, shape=(self.num,), replace=False,
                                  p=probs))
        else:
            return samples

        ind = ind.astype(jnp.int32)
        B = samples.shape[0]
        # Tiny problems: XLA's native gather beats kernel launch + padding.
        if B * self.num < _MIN_PALLAS_ELEMS:
            return jnp.take(samples, ind, axis=1)
        return gather_columns(samples, ind)


if __name__ == "__main__":
    key = jax.random.PRNGKey(0)
    (k_data, k_ind, k_rand, k_exp, k_rag, k_big, k_bigi, k_clu) = \
        jax.random.split(key, 8)

    # --- 1) single-block path: C fits in one tile ---------------------------
    B, C, NUM = 8, 1024, 384
    samples = jax.random.normal(k_data, (B, C), dtype=jnp.float32)
    test_ind = jnp.sort(jax.random.permutation(k_ind, C)[:NUM]).astype(jnp.int32)
    out_kernel = jax.block_until_ready(gather_columns(samples, test_ind))
    assert out_kernel.shape == (B, NUM)
    assert jnp.allclose(out_kernel, samples[:, test_ind]), "gather mismatch (1)"

    # bf16 dtype coverage on the same shape
    samples_bf = samples.astype(jnp.bfloat16)
    out_bf = jax.block_until_ready(gather_columns(samples_bf, test_ind))
    assert jnp.allclose(out_bf, samples_bf[:, test_ind]), "bf16 gather mismatch"

    # --- 2) ragged C + 2-way parallel split ----------------------------------
    Br, Cr, NUMr = 4, 200, 40
    samples_r = jax.random.normal(k_rag, (Br, Cr), dtype=jnp.float32)
    ind_r = jnp.sort(jax.random.permutation(k_rag, Cr)[:NUMr]).astype(jnp.int32)
    out_r = jax.block_until_ready(gather_columns(samples_r, ind_r))
    assert out_r.shape == (Br, NUMr)
    assert jnp.allclose(out_r, samples_r[:, ind_r]), "ragged gather mismatch"

    # --- 3) multi-block reduction, spread indices ----------------------------
    Bb, Cb, NUMb = 8, 4096, 256
    samples_b = jax.random.normal(k_big, (Bb, Cb), dtype=jnp.float32)
    ind_b = jnp.sort(jax.random.permutation(k_bigi, Cb)[:NUMb]).astype(jnp.int32)
    out_b = jax.block_until_ready(gather_columns(samples_b, ind_b))
    assert jnp.allclose(out_b, samples_b[:, ind_b]), "multi-block gather mismatch"

    # --- 4) clustered indices: most C blocks are skipped ---------------------
    ind_c = jnp.sort(jax.random.choice(k_clu, 700, shape=(NUMb,),
                                       replace=False)).astype(jnp.int32)
    out_c = jax.block_until_ready(gather_columns(samples_b, ind_c))
    assert jnp.allclose(out_c, samples_b[:, ind_c]), "clustered gather mismatch"

    # --- 5) full Sampler forward passes --------------------------------------
    out_rand = jax.block_until_ready(Sampler(NUM, 'random')(samples, k_rand))
    out_exp = jax.block_until_ready(Sampler(NUM, 'exp', rate=0.005)(samples, k_exp))
    out_zipf = jax.block_until_ready(Sampler(NUM, 'zipfs')(samples, k_exp))
    out_none = jax.block_until_ready(Sampler(NUM, 'identity')(samples, key))

    assert out_rand.shape == (B, NUM)
    assert out_exp.shape == (B, NUM)
    assert out_zipf.shape == (B, NUM)
    assert out_none.shape == (B, C)

    print("KERNEL_OK")
</pallas_src>

<mosaic_0001>
module attributes {stable_mosaic.version = 11 : i64} {
  func.func @_gather_kernel(%arg0: i32, %arg1: i32, %arg2: memref<1x1xi32, #tpu.memory_space<smem>>, %arg3: memref<1xi32, #tpu.memory_space<smem>>, %arg4: memref<1x384xi32, #tpu.memory_space<vmem>>, %arg5: memref<8x1024xf32, #tpu.memory_space<vmem>>, %arg6: memref<8x384xf32, #tpu.memory_space<vmem>>, %arg7: memref<8x384xf32, #tpu.memory_space<vmem>>) attributes {dimension_semantics = [#tpu.dimension_semantics<parallel>, #tpu.dimension_semantics<arbitrary>], iteration_bounds = array<i64: 1, 1>, scalar_prefetch = 2 : i64, scratch_operands = 1 : i64, tpu.core_type = #tpu.core_type<tc>, window_params = [{pipeline_mode = #tpu.pipeline_mode<synchronous>, transform_indices = @transform_0, window_bounds = array<i64: 1, 384>}, {transform_indices = @transform_1, window_bounds = array<i64: 8, 1024>}, {transform_indices = @transform_2, window_bounds = array<i64: 8, 384>}]} {
    %c0_i32 = arith.constant 0 : i32
    %0 = arith.cmpi eq, %arg1, %c0_i32 : i32
    %1 = arith.extui %0 : i1 to i32
    %c0_i32_0 = arith.constant 0 : i32
    %2 = arith.cmpi ne, %1, %c0_i32_0 : i32
    scf.if %2 {
      %cst = arith.constant 0.000000e+00 : f32
      %11 = vector.broadcast %cst : f32 to vector<8x384xf32>
      %c0 = arith.constant 0 : index
      %c0_4 = arith.constant 0 : index
      %12 = vector.load %arg7[%c0, %c0_4] : memref<8x384xf32, #tpu.memory_space<vmem>>, vector<8x384xf32>
      tpu.vector_store %arg7[%c0, %c0_4], %11 {strides = array<i32>} : memref<8x384xf32, #tpu.memory_space<vmem>>, vector<8x384xf32>,
    } else {
    }
    %3 = arith.index_cast %arg0 : i32 to index
    %4 = memref.load %arg3[%3] : memref<1xi32, #tpu.memory_space<smem>>
    %5 = arith.cmpi slt, %arg1, %4 : i32
    %6 = arith.extui %5 : i1 to i32
    %c0_i32_1 = arith.constant 0 : i32
    %7 = arith.cmpi ne, %6, %c0_i32_1 : i32
    scf.if %7 {
      %11 = arith.index_cast %arg0 : i32 to index
      %12 = arith.index_cast %arg1 : i32 to index
      %13 = memref.load %arg2[%11, %12] : memref<1x1xi32, #tpu.memory_space<smem>>
      %c1024_i32 = arith.constant 1024 : i32
      %14 = arith.muli %13, %c1024_i32 : i32
      %c0 = arith.constant 0 : index
      %c0_4 = arith.constant 0 : index
      %15 = vector.load %arg5[%c0, %c0_4] : memref<8x1024xf32, #tpu.memory_space<vmem>>, vector<8x1024xf32>
      %c0_5 = arith.constant 0 : index
      %c0_6 = arith.constant 0 : index
      %16 = vector.load %arg4[%c0_5, %c0_6] : memref<1x384xi32, #tpu.memory_space<vmem>>, vector<1x384xi32>
      %17 = vector.broadcast %14 : i32 to vector<1x384xi32>
      %18 = arith.subi %16, %17 : vector<1x384xi32>
      %19 = tpu.iota {dimensions = array<i32: 0>} : vector<1024x384xi32>
      %20 = vector.broadcast %18 : vector<1x384xi32> to vector<1024x384xi32>
      %21 = arith.cmpi eq, %19, %20 : vector<1024x384xi32>
      %22 = arith.extui %21 : vector<1024x384xi1> to vector<1024x384xi32>
      %23 = arith.sitofp %22 : vector<1024x384xi32> to vector<1024x384xf32>
      %c0_7 = arith.constant 0 : index
      %c0_8 = arith.constant 0 : index
      %24 = vector.load %arg7[%c0_7, %c0_8] : memref<8x384xf32, #tpu.memory_space<vmem>>, vector<8x384xf32>
      %cst = arith.constant dense<0.000000e+00> : vector<8x384xf32>
      %25 = tpu.matmul %15, %23, %cst {dimension_numbers = #tpu.dot_dimension_numbers<[1], [0], [0], [1], [0, 0, 1, 1], [], []>} : vector<8x1024xf32>, vector<1024x384xf32>, vector<8x384xf32> -> vector<8x384xf32>
      %26 = arith.addf %24, %25 : vector<8x384xf32>
      %c0_9 = arith.constant 0 : index
      %c0_10 = arith.constant 0 : index
      %27 = vector.load %arg7[%c0_9, %c0_10] : memref<8x384xf32, #tpu.memory_space<vmem>>, vector<8x384xf32>
      tpu.vector_store %arg7[%c0_9, %c0_10], %26 {strides = array<i32>} : memref<8x384xf32, #tpu.memory_space<vmem>>, vector<8x384xf32>,
    } else {
    }
    %c0_i32_2 = arith.constant 0 : i32
    %8 = arith.cmpi eq, %arg1, %c0_i32_2 : i32
    %9 = arith.extui %8 : i1 to i32
    %c0_i32_3 = arith.constant 0 : i32
    %10 = arith.cmpi ne, %9, %c0_i32_3 : i32
    scf.if %10 {
      %c0 = arith.constant 0 : index
      %c0_4 = arith.constant 0 : index
      %11 = vector.load %arg7[%c0, %c0_4] : memref<8x384xf32, #tpu.memory_space<vmem>>, vector<8x384xf32>
      %c0_5 = arith.constant 0 : index
      %c0_6 = arith.constant 0 : index
      %12 = vector.load %arg6[%c0_5, %c0_6] : memref<8x384xf32, #tpu.memory_space<vmem>>, vector<8x384xf32>
      tpu.vector_store %arg6[%c0_5, %c0_6], %11 {strides = array<i32>} : memref<8x384xf32, #tpu.memory_space<vmem>>, vector<8x384xf32>,
    } else {
    }
    return
  }
  func.func @transform_0(%arg0: i32, %arg1: i32, %arg2: memref<1x1xi32, #tpu.memory_space<smem>>, %arg3: memref<1xi32, #tpu.memory_space<smem>>) -> (i32, i32) {
    %c0_i32 = arith.constant 0 : i32
    %c0_i32_0 = arith.constant 0 : i32
    %c0_i32_1 = arith.constant 0 : i32
    return %c0_i32, %c0_i32_0 : i32, i32
  }
  func.func @transform_1(%arg0: i32, %arg1: i32, %arg2: memref<1x1xi32, #tpu.memory_space<smem>>, %arg3: memref<1xi32, #tpu.memory_space<smem>>) -> (i32, i32) {
    %0 = arith.index_cast %arg0 : i32 to index
    %1 = arith.index_cast %arg1 : i32 to index
    %2 = memref.load %arg2[%0, %1] : memref<1x1xi32, #tpu.memory_space<smem>>
    %c0_i32 = arith.constant 0 : i32
    %c0_i32_0 = arith.constant 0 : i32
    return %c0_i32, %2 : i32, i32
  }
  func.func @transform_2(%arg0: i32, %arg1: i32, %arg2: memref<1x1xi32, #tpu.memory_space<smem>>, %arg3: memref<1xi32, #tpu.memory_space<smem>>) -> (i32, i32) {
    %c0_i32 = arith.constant 0 : i32
    %c0_i32_0 = arith.constant 0 : i32
    return %c0_i32, %arg0 : i32, i32
  }
}

</mosaic_0001>

<llo_original>
// kernel: tpu_custom_call.1
$region0: #{tpu_custom_call.1}
  #allocation0 [shape = 'u32[]', space=smem, size = 0x4, offset = 0x4, fixed_abs, tag = 'smem constant byte address 0x4 - core index']
  #allocation1 [shape = 'u32[144,128]{1,0:T(1,128)}', space=vmem, size = 0x12000, scoped, tag = 'internal scratch']
  #allocation2 [shape = 'f32[8,384]{1,0:T(8,128)}', space=vmem, size = 0x3000, scoped, tag = 'scratch operand']
  #allocation3 [shape = 's32[1]{0}', space=sflag, size = 0x4, scoped, tag = 'scoped memory for tpu_custom_call.1']
  #allocation4 [shape = 's32[1,1]{1,0:T(1,128)S(6)}', space=smem, size = 0x200, scoped, tag = 'prefetched SMEM operand 0']
  #allocation5 [shape = 's32[1]{0:T(128)S(6)}', space=smem, size = 0x200, scoped, tag = 'prefetched SMEM operand 1']
  %s0 = inlined_call_operand.<no memory space> [shape: s32[1,1], index: 0, kind: input, shape index: {}]
  %s1 = inlined_call_operand.<no memory space> [shape: s32[1], index: 1, kind: input, shape index: {}]
  %s2 = inlined_call_operand.vmem [shape: s32[1,384], index: 2, kind: input, shape index: {}]
  %s3 = inlined_call_operand.hbm [shape: f32[8,1024], index: 3, kind: input, shape index: {}]
  %s4 = inlined_call_operand.hbm [shape: f32[8,384], index: 4, kind: output, shape index: {}]
  %s5 = sld [smem:[#allocation0]]
  $region34: #{tpu_custom_call.1} parent=0
    _
  %s7 = ssub.s32 1, %s5
  %s8 = scalar_select 0, %s7, %s5
  %9 = sst [smem:[#allocation4]] %s0
  %10 = sst [smem:[#allocation5]] %s1
  $region1: #{tpu_custom_call.1} parent=0
    #allocation6 [shape = 'u8[32768]{0}', space=vmem, size = 0x8000, scoped, tag = 'input window, operand 3, single buffered']
    #allocation7 [shape = 's32[1]{0}', space=sflag, size = 0x4, scoped, tag = 'scoped memory for tpu_custom_call.1']
    #allocation8 [shape = 's32[1]{0}', space=sflag, size = 0x4, scoped, tag = 'scoped memory for tpu_custom_call.1']
    #allocation9 [shape = 'u8[12288]{0}', space=vmem, size = 0x3000, scoped, tag = 'output window, operand 0, single buffered']
    %11 = vsyncpa [#allocation7], 0
    %12 = vsyncpa [#allocation8], 0
    // Predicated region
    $region2: #{tpu_custom_call.1} parent=1 // pred_check
      _
    $region3: #{tpu_custom_call.1} parent=1 // pred_check_branch
      %14 = sbr.rel (0) target = $region5
    $region4: #{tpu_custom_call.1} parent=1 // pred_region
      _
    $region5: #{tpu_custom_call.1} parent=1 // pred_fallthru
      _
    // Predicated region
    $region6: #{tpu_custom_call.1} parent=1 // pred_check
      _
    $region7: #{tpu_custom_call.1} parent=1 // pred_check_branch
      %16 = sbr.rel (0) target = $region9
    $region8: #{tpu_custom_call.1} parent=1 // pred_region
      %s17 = sadd.s32 0, 0
      %s18 = smul.u32 %s17, 128
      %s19 = sadd.s32 %s18, 0
      %s20 = sld [smem:[#allocation4 + %s19]]
      %s21 = smul.u32 8, %s20
      %s23 = ssub.s32 1024, 1024
      %24 = vsyncadd [#allocation7], %s23
      %s25 = smul.addr %s21, 128
      %s26 = scalar_lea.hbm %s3, %s25
      %s28 = sshll.u32 [#allocation6], 4
      %s29 = int_to_ptr.vmem [resolvable:$true] %s28
      %31 = dma.hbm_to_vmem [thread:$0]  %s26, 1024, %s29, [#allocation7]
    $region9: #{tpu_custom_call.1} parent=1 // pred_fallthru
      _
    // Predicated region
    $region10: #{tpu_custom_call.1} parent=1 // pred_check
      _
    $region11: #{tpu_custom_call.1} parent=1 // pred_check_branch
      %33 = sbr.rel (0) target = $region13
    $region12: #{tpu_custom_call.1} parent=1 // pred_region
      %34 = dma.done [#allocation7], 1024
    $region13: #{tpu_custom_call.1} parent=1 // pred_fallthru
      _
    %s35 = sadd.s32 0, 0
    %s36 = smul.u32 %s35, 128
    %s37 = sadd.s32 %s36, 0
    %s38 = sld [smem:[#allocation4 + %s37]]
    %s39 = smul.u32 8, %s38
    %p40 = scmp.eq.s32.totalorder 0, 0
    // Predicated region
    $region14: #{tpu_custom_call.1} parent=1 // pred_check
      %p41 = pneg %p40
    $region15: #{tpu_custom_call.1} parent=1 // pred_check_branch
      %43 = sbr.rel (%p41) target = $region17
    $region16: #{tpu_custom_call.1} parent=1 // pred_region
      %44 = vst [vmem:[#allocation2] sm:$0xff] 0.0
      %45 = vst [vmem:[#allocation2 + $0x8] sm:$0xff] 0.0
      %46 = vst [vmem:[#allocation2 + $0x10] sm:$0xff] 0.0
    $region17: #{tpu_custom_call.1} parent=1 // pred_fallthru
      _
    %s47 = sld [smem:[#allocation5]]
    %p48 = scmp.lt.s32.totalorder 0, %s47
    // Predicated region
    $region18: #{tpu_custom_call.1} parent=1 // pred_check
      %p49 = pneg %p48
    $region19: #{tpu_custom_call.1} parent=1 // pred_check_branch
      %51 = sbr.rel (%p49) target = $region21
    $region20: #{tpu_custom_call.1} parent=1 // pred_region
      %s52 = sadd.s32 0, 0
      %s53 = smul.u32 %s52, 128
      %s54 = sadd.s32 %s53, 0
      %s55 = sld [smem:[#allocation4 + %s54]]
      %s56 = smul.u32 %s55, 1024
      %v57 = vld [vmem:[#allocation6] sm:$0xff]
      %v58 = vld [vmem:[#allocation6 + $0x8] sm:$0xff]
      %v59 = vld [vmem:[#allocation6 + $0x10] sm:$0xff]
      %v60 = vld [vmem:[#allocation6 + $0x18] sm:$0xff]
      %v61 = vld [vmem:[#allocation6 + $0x20] sm:$0xff]
      %v62 = vld [vmem:[#allocation6 + $0x28] sm:$0xff]
      %v63 = vld [vmem:[#allocation6 + $0x30] sm:$0xff]
      %v64 = vld [vmem:[#allocation6 + $0x38] sm:$0xff]
      %v65 = vld [vmem:[%s2] sm:$0x7]
      %v66 = vstv %s56
      %v67 = vsub.s32 %v65, %v66
      %v68 = vlaneseq
      %v69 = vshrl.u32 %v68, 7
      %v70 = vadd.s32 %v69, 8
      %v71 = vadd.s32 %v69, 16
      %v72 = vadd.s32 %v69, 24
      %v73 = vadd.s32 %v69, 32
      %v74 = vadd.s32 %v69, 40
      %v75 = vadd.s32 %v69, 48
      %v76 = vadd.s32 %v69, 56
      %v77 = vadd.s32 %v69, 64
      %v78 = vadd.s32 %v69, 72
      %v79 = vadd.s32 %v69, 80
      %v80 = vadd.s32 %v69, 88
      %v81 = vadd.s32 %v69, 96
      %v82 = vadd.s32 %v69, 104
      %v83 = vadd.s32 %v69, 112
      %v84 = vadd.s32 %v69, 120
      %v85 = vadd.s32 %v69, 128
      %v86 = vadd.s32 %v69, 136
      %v87 = vadd.s32 %v69, 144
      %v88 = vadd.s32 %v69, 152
      %v89 = vadd.s32 %v69, 160
      %v90 = vadd.s32 %v69, 168
      %v91 = vadd.s32 %v69, 176
      %v92 = vadd.s32 %v69, 184
      %v93 = vadd.s32 %v69, 192
      %v94 = vadd.s32 %v69, 200
      %v95 = vadd.s32 %v69, 208
      %v96 = vadd.s32 %v69, 216
      %v97 = vadd.s32 %v69, 224
      %v98 = vadd.s32 %v69, 232
      %v99 = vadd.s32 %v69, 240
      %v100 = vadd.s32 %v69, 248
      %v101 = vadd.s32 %v69, 256
      %v102 = vadd.s32 %v69, 264
      %v103 = vadd.s32 %v69, 272
      %v104 = vadd.s32 %v69, 280
      %v105 = vadd.s32 %v69, 288
      %v106 = vadd.s32 %v69, 296
      %v107 = vadd.s32 %v69, 304
      %v108 = vadd.s32 %v69, 312
      %v109 = vadd.s32 %v69, 320
      %v110 = vadd.s32 %v69, 328
      %v111 = vadd.s32 %v69, 336
      %v112 = vadd.s32 %v69, 344
      %v113 = vadd.s32 %v69, 352
      %v114 = vadd.s32 %v69, 360
      %v115 = vadd.s32 %v69, 368
      %v116 = vadd.s32 %v69, 376
      %v117 = vadd.s32 %v69, 384
      %v118 = vadd.s32 %v69, 392
      %v119 = vadd.s32 %v69, 400
      %v120 = vadd.s32 %v69, 408
      %v121 = vadd.s32 %v69, 416
      %v122 = vadd.s32 %v69, 424
      %v123 = vadd.s32 %v69, 432
      %v124 = vadd.s32 %v69, 440
      %v125 = vadd.s32 %v69, 448
      %v126 = vadd.s32 %v69, 456
      %v127 = vadd.s32 %v69, 464
      %v128 = vadd.s32 %v69, 472
      %v129 = vadd.s32 %v69, 480
      %v130 = vadd.s32 %v69, 488
      %v131 = vadd.s32 %v69, 496
      %v132 = vadd.s32 %v69, 504
      %v133 = vadd.s32 %v69, 512
      %v134 = vadd.s32 %v69, 520
      %v135 = vadd.s32 %v69, 528
      %v136 = vadd.s32 %v69, 536
      %v137 = vadd.s32 %v69, 544
      %v138 = vadd.s32 %v69, 552
      %v139 = vadd.s32 %v69, 560
      %v140 = vadd.s32 %v69, 568
      %v141 = vadd.s32 %v69, 576
      %v142 = vadd.s32 %v69, 584
      %v143 = vadd.s32 %v69, 592
      %v144 = vadd.s32 %v69, 600
      %v145 = vadd.s32 %v69, 608
      %v146 = vadd.s32 %v69, 616
      %v147 = vadd.s32 %v69, 624
      %v148 = vadd.s32 %v69, 632
      %v149 = vadd.s32 %v69, 640
      %v150 = vadd.s32 %v69, 648
      %v151 = vadd.s32 %v69, 656
      %v152 = vadd.s32 %v69, 664
      %v153 = vadd.s32 %v69, 672
      %v154 = vadd.s32 %v69, 680
      %v155 = vadd.s32 %v69, 688
      %v156 = vadd.s32 %v69, 696
      %v157 = vadd.s32 %v69, 704
      %v158 = vadd.s32 %v69, 712
      %v159 = vadd.s32 %v69, 720
      %v160 = vadd.s32 %v69, 728
      %v161 = vadd.s32 %v69, 736
      %v162 = vadd.s32 %v69, 744
      %v163 = vadd.s32 %v69, 752
      %v164 = vadd.s32 %v69, 760
      %v165 = vadd.s32 %v69, 768
      %v166 = vadd.s32 %v69, 776
      %v167 = vadd.s32 %v69, 784
      %v168 = vadd.s32 %v69, 792
      %v169 = vadd.s32 %v69, 800
      %v170 = vadd.s32 %v69, 808
      %v171 = vadd.s32 %v69, 816
      %v172 = vadd.s32 %v69, 824
      %v173 = vadd.s32 %v69, 832
      %v174 = vadd.s32 %v69, 840
      %v175 = vadd.s32 %v69, 848
      %v176 = vadd.s32 %v69, 856
      %v177 = vadd.s32 %v69, 864
      %v178 = vadd.s32 %v69, 872
      %v179 = vadd.s32 %v69, 880
      %v180 = vadd.s32 %v69, 888
      %v181 = vadd.s32 %v69, 896
      %v182 = vadd.s32 %v69, 904
      %v183 = vadd.s32 %v69, 912
      %v184 = vadd.s32 %v69, 920
      %v185 = vadd.s32 %v69, 928
      %v186 = vadd.s32 %v69, 936
      %v187 = vadd.s32 %v69, 944
      %v188 = vadd.s32 %v69, 952
      %v189 = vadd.s32 %v69, 960
      %v190 = vadd.s32 %v69, 968
      %v191 = vadd.s32 %v69, 976
      %v192 = vadd.s32 %v69, 984
      %v193 = vadd.s32 %v69, 992
      %v194 = vadd.s32 %v69, 1000
      %v195 = vadd.s32 %v69, 1008
      %v196 = vadd.s32 %v69, 1016
      %v197 = vlaneseq
      %v198 = vshrl.u32 %v197, 7
      %v199 = vsub.s32 0, %v198
      %v200 = vrot.slane %v67, %v199
      %v201 = vlaneseq
      %v202 = vshrl.u32 %v201, 7
      %v203 = vsub.s32 1, %v202
      %v204 = vrot.slane %v67, %v203
      %v205 = vlaneseq
      %v206 = vshrl.u32 %v205, 7
      %v207 = vsub.s32 2, %v206
      %v208 = vrot.slane %v67, %v207
      %vm209 = vcmp.eq.s32.totalorder %v69, %v200
      %vm210 = vcmp.eq.s32.totalorder %v69, %v204
      %vm211 = vcmp.eq.s32.totalorder %v69, %v208
      %vm212 = vcmp.eq.s32.totalorder %v70, %v200
      %vm213 = vcmp.eq.s32.totalorder %v70, %v204
      %vm214 = vcmp.eq.s32.totalorder %v70, %v208
      %vm215 = vcmp.eq.s32.totalorder %v71, %v200
      %vm216 = vcmp.eq.s32.totalorder %v71, %v204
      %vm217 = vcmp.eq.s32.totalorder %v71, %v208
      %vm218 = vcmp.eq.s32.totalorder %v72, %v200
      %vm219 = vcmp.eq.s32.totalorder %v72, %v204
      %vm220 = vcmp.eq.s32.totalorder %v72, %v208
      %vm221 = vcmp.eq.s32.totalorder %v73, %v200
      %vm222 = vcmp.eq.s32.totalorder %v73, %v204
      %vm223 = vcmp.eq.s32.totalorder %v73, %v208
      %vm224 = vcmp.eq.s32.totalorder %v74, %v200
      %vm225 = vcmp.eq.s32.totalorder %v74, %v204
      %vm226 = vcmp.eq.s32.totalorder %v74, %v208
      %vm227 = vcmp.eq.s32.totalorder %v75, %v200
      %vm228 = vcmp.eq.s32.totalorder %v75, %v204
      %vm229 = vcmp.eq.s32.totalorder %v75, %v208
      %vm230 = vcmp.eq.s32.totalorder %v76, %v200
      %vm231 = vcmp.eq.s32.totalorder %v76, %v204
      %vm232 = vcmp.eq.s32.totalorder %v76, %v208
      %vm233 = vcmp.eq.s32.totalorder %v77, %v200
      %vm234 = vcmp.eq.s32.totalorder %v77, %v204
      %vm235 = vcmp.eq.s32.totalorder %v77, %v208
      %vm236 = vcmp.eq.s32.totalorder %v78, %v200
      %vm237 = vcmp.eq.s32.totalorder %v78, %v204
      %vm238 = vcmp.eq.s32.totalorder %v78, %v208
      %vm239 = vcmp.eq.s32.totalorder %v79, %v200
      %vm240 = vcmp.eq.s32.totalorder %v79, %v204
      %vm241 = vcmp.eq.s32.totalorder %v79, %v208
      %vm242 = vcmp.eq.s32.totalorder %v80, %v200
      %vm243 = vcmp.eq.s32.totalorder %v80, %v204
      %vm244 = vcmp.eq.s32.totalorder %v80, %v208
      %vm245 = vcmp.eq.s32.totalorder %v81, %v200
      %vm246 = vcmp.eq.s32.totalorder %v81, %v204
      %vm247 = vcmp.eq.s32.totalorder %v81, %v208
      %vm248 = vcmp.eq.s32.totalorder %v82, %v200
      %vm249 = vcmp.eq.s32.totalorder %v82, %v204
      %vm250 = vcmp.eq.s32.totalorder %v82, %v208
      %vm251 = vcmp.eq.s32.totalorder %v83, %v200
      %vm252 = vcmp.eq.s32.totalorder %v83, %v204
      %vm253 = vcmp.eq.s32.totalorder %v83, %v208
      %vm254 = vcmp.eq.s32.totalorder %v84, %v200
      %vm255 = vcmp.eq.s32.totalorder %v84, %v204
      %vm256 = vcmp.eq.s32.totalorder %v84, %v208
      %vm257 = vcmp.eq.s32.totalorder %v85, %v200
      %vm258 = vcmp.eq.s32.totalorder %v85, %v204
      %vm259 = vcmp.eq.s32.totalorder %v85, %v208
      %vm260 = vcmp.eq.s32.totalorder %v86, %v200
      %vm261 = vcmp.eq.s32.totalorder %v86, %v204
      %vm262 = vcmp.eq.s32.totalorder %v86, %v208
      %vm263 = vcmp.eq.s32.totalorder %v87, %v200
      %vm264 = vcmp.eq.s32.totalorder %v87, %v204
      %vm265 = vcmp.eq.s32.totalorder %v87, %v208
      %vm266 = vcmp.eq.s32.totalorder %v88, %v200
      %vm267 = vcmp.eq.s32.totalorder %v88, %v204
      %vm268 = vcmp.eq.s32.totalorder %v88, %v208
      %vm269 = vcmp.eq.s32.totalorder %v89, %v200
      %vm270 = vcmp.eq.s32.totalorder %v89, %v204
      %vm271 = vcmp.eq.s32.totalorder %v89, %v208
      %vm272 = vcmp.eq.s32.totalorder %v90, %v200
      %vm273 = vcmp.eq.s32.totalorder %v90, %v204
      %vm274 = vcmp.eq.s32.totalorder %v90, %v208
      %vm275 = vcmp.eq.s32.totalorder %v91, %v200
      %vm276 = vcmp.eq.s32.totalorder %v91, %v204
      %vm277 = vcmp.eq.s32.totalorder %v91, %v208
      %vm278 = vcmp.eq.s32.totalorder %v92, %v200
      %vm279 = vcmp.eq.s32.totalorder %v92, %v204
      %vm280 = vcmp.eq.s32.totalorder %v92, %v208
      %vm281 = vcmp.eq.s32.totalorder %v93, %v200
      %vm282 = vcmp.eq.s32.totalorder %v93, %v204
      %vm283 = vcmp.eq.s32.totalorder %v93, %v208
      %vm284 = vcmp.eq.s32.totalorder %v94, %v200
      %vm285 = vcmp.eq.s32.totalorder %v94, %v204
      %vm286 = vcmp.eq.s32.totalorder %v94, %v208
      %vm287 = vcmp.eq.s32.totalorder %v95, %v200
      %vm288 = vcmp.eq.s32.totalorder %v95, %v204
      %vm289 = vcmp.eq.s32.totalorder %v95, %v208
      %vm290 = vcmp.eq.s32.totalorder %v96, %v200
      %vm291 = vcmp.eq.s32.totalorder %v96, %v204
      %vm292 = vcmp.eq.s32.totalorder %v96, %v208
      %vm293 = vcmp.eq.s32.totalorder %v97, %v200
      %vm294 = vcmp.eq.s32.totalorder %v97, %v204
      %vm295 = vcmp.eq.s32.totalorder %v97, %v208
      %vm296 = vcmp.eq.s32.totalorder %v98, %v200
      %vm297 = vcmp.eq.s32.totalorder %v98, %v204
      %vm298 = vcmp.eq.s32.totalorder %v98, %v208
      %vm299 = vcmp.eq.s32.totalorder %v99, %v200
      %vm300 = vcmp.eq.s32.totalorder %v99, %v204
      %vm301 = vcmp.eq.s32.totalorder %v99, %v208
      %vm302 = vcmp.eq.s32.totalorder %v100, %v200
      %vm303 = vcmp.eq.s32.totalorder %v100, %v204
      %vm304 = vcmp.eq.s32.totalorder %v100, %v208
      %vm305 = vcmp.eq.s32.totalorder %v101, %v200
      %vm306 = vcmp.eq.s32.totalorder %v101, %v204
      %vm307 = vcmp.eq.s32.totalorder %v101, %v208
      %vm308 = vcmp.eq.s32.totalorder %v102, %v200
      %vm309 = vcmp.eq.s32.totalorder %v102, %v204
      %vm310 = vcmp.eq.s32.totalorder %v102, %v208
      %vm311 = vcmp.eq.s32.totalorder %v103, %v200
      %vm312 = vcmp.eq.s32.totalorder %v103, %v204
      %vm313 = vcmp.eq.s32.totalorder %v103, %v208
      %vm314 = vcmp.eq.s32.totalorder %v104, %v200
      %vm315 = vcmp.eq.s32.totalorder %v104, %v204
      %vm316 = vcmp.eq.s32.totalorder %v104, %v208
      %vm317 = vcmp.eq.s32.totalorder %v105, %v200
      %vm318 = vcmp.eq.s32.totalorder %v105, %v204
      %vm319 = vcmp.eq.s32.totalorder %v105, %v208
      %vm320 = vcmp.eq.s32.totalorder %v106, %v200
      %vm321 = vcmp.eq.s32.totalorder %v106, %v204
      %vm322 = vcmp.eq.s32.totalorder %v106, %v208
      %vm323 = vcmp.eq.s32.totalorder %v107, %v200
      %vm324 = vcmp.eq.s32.totalorder %v107, %v204
      %vm325 = vcmp.eq.s32.totalorder %v107, %v208
      %vm326 = vcmp.eq.s32.totalorder %v108, %v200
      %vm327 = vcmp.eq.s32.totalorder %v108, %v204
      %vm328 = vcmp.eq.s32.totalorder %v108, %v208
      %vm329 = vcmp.eq.s32.totalorder %v109, %v200
      %vm330 = vcmp.eq.s32.totalorder %v109, %v204
      %vm331 = vcmp.eq.s32.totalorder %v109, %v208
      %vm332 = vcmp.eq.s32.totalorder %v110, %v200
      %vm333 = vcmp.eq.s32.totalorder %v110, %v204
      %vm334 = vcmp.eq.s32.totalorder %v110, %v208
      %vm335 = vcmp.eq.s32.totalorder %v111, %v200
      %vm336 = vcmp.eq.s32.totalorder %v111, %v204
      %vm337 = vcmp.eq.s32.totalorder %v111, %v208
      %vm338 = vcmp.eq.s32.totalorder %v112, %v200
      %vm339 = vcmp.eq.s32.totalorder %v112, %v204
      %vm340 = vcmp.eq.s32.totalorder %v112, %v208
      %vm341 = vcmp.eq.s32.totalorder %v113, %v200
      %vm342 = vcmp.eq.s32.totalorder %v113, %v204
      %vm343 = vcmp.eq.s32.totalorder %v113, %v208
      %vm344 = vcmp.eq.s32.totalorder %v114, %v200
      %vm345 = vcmp.eq.s32.totalorder %v114, %v204
      %vm346 = vcmp.eq.s32.totalorder %v114, %v208
      %vm347 = vcmp.eq.s32.totalorder %v115, %v200
      %vm348 = vcmp.eq.s32.totalorder %v115, %v204
      %vm349 = vcmp.eq.s32.totalorder %v115, %v208
      %vm350 = vcmp.eq.s32.totalorder %v116, %v200
      %vm351 = vcmp.eq.s32.totalorder %v116, %v204
      %vm352 = vcmp.eq.s32.totalorder %v116, %v208
      %vm353 = vcmp.eq.s32.totalorder %v117, %v200
      %vm354 = vcmp.eq.s32.totalorder %v117, %v204
      %vm355 = vcmp.eq.s32.totalorder %v117, %v208
      %vm356 = vcmp.eq.s32.totalorder %v118, %v200
      %vm357 = vcmp.eq.s32.totalorder %v118, %v204
      %vm358 = vcmp.eq.s32.totalorder %v118, %v208
      %vm359 = vcmp.eq.s32.totalorder %v119, %v200
      %vm360 = vcmp.eq.s32.totalorder %v119, %v204
      %vm361 = vcmp.eq.s32.totalorder %v119, %v208
      %vm362 = vcmp.eq.s32.totalorder %v120, %v200
      %vm363 = vcmp.eq.s32.totalorder %v120, %v204
      %vm364 = vcmp.eq.s32.totalorder %v120, %v208
      %vm365 = vcmp.eq.s32.totalorder %v121, %v200
      %vm366 = vcmp.eq.s32.totalorder %v121, %v204
      %vm367 = vcmp.eq.s32.totalorder %v121, %v208
      %vm368 = vcmp.eq.s32.totalorder %v122, %v200
      %vm369 = vcmp.eq.s32.totalorder %v122, %v204
      %vm370 = vcmp.eq.s32.totalorder %v122, %v208
      %vm371 = vcmp.eq.s32.totalorder %v123, %v200
      %vm372 = vcmp.eq.s32.totalorder %v123, %v204
      %vm373 = vcmp.eq.s32.totalorder %v123, %v208
      %vm374 = vcmp.eq.s32.totalorder %v124, %v200
      %vm375 = vcmp.eq.s32.totalorder %v124, %v204
      %vm376 = vcmp.eq.s32.totalorder %v124, %v208
      %vm377 = vcmp.eq.s32.totalorder %v125, %v200
      %vm378 = vcmp.eq.s32.totalorder %v125, %v204
      %vm379 = vcmp.eq.s32.totalorder %v125, %v208
      %vm380 = vcmp.eq.s32.totalorder %v126, %v200
      %vm381 = vcmp.eq.s32.totalorder %v126, %v204
      %vm382 = vcmp.eq.s32.totalorder %v126, %v208
      %vm383 = vcmp.eq.s32.totalorder %v127, %v200
      %vm384 = vcmp.eq.s32.totalorder %v127, %v204
      %vm385 = vcmp.eq.s32.totalorder %v127, %v208
      %vm386 = vcmp.eq.s32.totalorder %v128, %v200
      %vm387 = vcmp.eq.s32.totalorder %v128, %v204
      %vm388 = vcmp.eq.s32.totalorder %v128, %v208
      %vm389 = vcmp.eq.s32.totalorder %v129, %v200
      %vm390 = vcmp.eq.s32.totalorder %v129, %v204
      %vm391 = vcmp.eq.s32.totalorder %v129, %v208
      %vm392 = vcmp.eq.s32.totalorder %v130, %v200
      %vm393 = vcmp.eq.s32.totalorder %v130, %v204
      %vm394 = vcmp.eq.s32.totalorder %v130, %v208
      %vm395 = vcmp.eq.s32.totalorder %v131, %v200
      %vm396 = vcmp.eq.s32.totalorder %v131, %v204
      %vm397 = vcmp.eq.s32.totalorder %v131, %v208
      %vm398 = vcmp.eq.s32.totalorder %v132, %v200
      %vm399 = vcmp.eq.s32.totalorder %v132, %v204
      %vm400 = vcmp.eq.s32.totalorder %v132, %v208
      %vm401 = vcmp.eq.s32.totalorder %v133, %v200
      %vm402 = vcmp.eq.s32.totalorder %v133, %v204
      %vm403 = vcmp.eq.s32.totalorder %v133, %v208
      %vm404 = vcmp.eq.s32.totalorder %v134, %v200
      %vm405 = vcmp.eq.s32.totalorder %v134, %v204
      %vm406 = vcmp.eq.s32.totalorder %v134, %v208
      %vm407 = vcmp.eq.s32.totalorder %v135, %v200
      %vm408 = vcmp.eq.s32.totalorder %v135, %v204
      %vm409 = vcmp.eq.s32.totalorder %v135, %v208
      %vm410 = vcmp.eq.s32.totalorder %v136, %v200
      %vm411 = vcmp.eq.s32.totalorder %v136, %v204
      %vm412 = vcmp.eq.s32.totalorder %v136, %v208
      %vm413 = vcmp.eq.s32.totalorder %v137, %v200
      %vm414 = vcmp.eq.s32.totalorder %v137, %v204
      %vm415 = vcmp.eq.s32.totalorder %v137, %v208
      %vm416 = vcmp.eq.s32.totalorder %v138, %v200
      %vm417 = vcmp.eq.s32.totalorder %v138, %v204
      %vm418 = vcmp.eq.s32.totalorder %v138, %v208
      %vm419 = vcmp.eq.s32.totalorder %v139, %v200
      %vm420 = vcmp.eq.s32.totalorder %v139, %v204
      %vm421 = vcmp.eq.s32.totalorder %v139, %v208
      %vm422 = vcmp.eq.s32.totalorder %v140, %v200
      %vm423 = vcmp.eq.s32.totalorder %v140, %v204
      %vm424 = vcmp.eq.s32.totalorder %v140, %v208
      %vm425 = vcmp.eq.s32.totalorder %v141, %v200
      %vm426 = vcmp.eq.s32.totalorder %v141, %v204
      %vm427 = vcmp.eq.s32.totalorder %v141, %v208
      %vm428 = vcmp.eq.s32.totalorder %v142, %v200
      %vm429 = vcmp.eq.s32.totalorder %v142, %v204
      %vm430 = vcmp.eq.s32.totalorder %v142, %v208
      %vm431 = vcmp.eq.s32.totalorder %v143, %v200
      %vm432 = vcmp.eq.s32.totalorder %v143, %v204
      %vm433 = vcmp.eq.s32.totalorder %v143, %v208
      %vm434 = vcmp.eq.s32.totalorder %v144, %v200
      %vm435 = vcmp.eq.s32.totalorder %v144, %v204
      %vm436 = vcmp.eq.s32.totalorder %v144, %v208
      %vm437 = vcmp.eq.s32.totalorder %v145, %v200
      %vm438 = vcmp.eq.s32.totalorder %v145, %v204
      %vm439 = vcmp.eq.s32.totalorder %v145, %v208
      %vm440 = vcmp.eq.s32.totalorder %v146, %v200
      %vm441 = vcmp.eq.s32.totalorder %v146, %v204
      %vm442 = vcmp.eq.s32.totalorder %v146, %v208
      %vm443 = vcmp.eq.s32.totalorder %v147, %v200
      %vm444 = vcmp.eq.s32.totalorder %v147, %v204
      %vm445 = vcmp.eq.s32.totalorder %v147, %v208
      %vm446 = vcmp.eq.s32.totalorder %v148, %v200
      %vm447 = vcmp.eq.s32.totalorder %v148, %v204
      %vm448 = vcmp.eq.s32.totalorder %v148, %v208
      %vm449 = vcmp.eq.s32.totalorder %v149, %v200
      %vm450 = vcmp.eq.s32.totalorder %v149, %v204
      %vm451 = vcmp.eq.s32.totalorder %v149, %v208
      %vm452 = vcmp.eq.s32.totalorder %v150, %v200
      %vm453 = vcmp.eq.s32.totalorder %v150, %v204
      %vm454 = vcmp.eq.s32.totalorder %v150, %v208
      %vm455 = vcmp.eq.s32.totalorder %v151, %v200
      %vm456 = vcmp.eq.s32.totalorder %v151, %v204
      %vm457 = vcmp.eq.s32.totalorder %v151, %v208
      %vm458 = vcmp.eq.s32.totalorder %v152, %v200
      %vm459 = vcmp.eq.s32.totalorder %v152, %v204
      %vm460 = vcmp.eq.s32.totalorder %v152, %v208
      %vm461 = vcmp.eq.s32.totalorder %v153, %v200
      %vm462 = vcmp.eq.s32.totalorder %v153, %v204
      %vm463 = vcmp.eq.s32.totalorder %v153, %v208
      %vm464 = vcmp.eq.s32.totalorder %v154, %v200
      %vm465 = vcmp.eq.s32.totalorder %v154, %v204
      %vm466 = vcmp.eq.s32.totalorder %v154, %v208
      %vm467 = vcmp.eq.s32.totalorder %v155, %v200
      %vm468 = vcmp.eq.s32.totalorder %v155, %v204
      %vm469 = vcmp.eq.s32.totalorder %v155, %v208
      %vm470 = vcmp.eq.s32.totalorder %v156, %v200
      %vm471 = vcmp.eq.s32.totalorder %v156, %v204
      %vm472 = vcmp.eq.s32.totalorder %v156, %v208
      %vm473 = vcmp.eq.s32.totalorder %v157, %v200
      %vm474 = vcmp.eq.s32.totalorder %v157, %v204
      %vm475 = vcmp.eq.s32.totalorder %v157, %v208
      %vm476 = vcmp.eq.s32.totalorder %v158, %v200
      %vm477 = vcmp.eq.s32.totalorder %v158, %v204
      %vm478 = vcmp.eq.s32.totalorder %v158, %v208
      %vm479 = vcmp.eq.s32.totalorder %v159, %v200
      %vm480 = vcmp.eq.s32.totalorder %v159, %v204
      %vm481 = vcmp.eq.s32.totalorder %v159, %v208
      %vm482 = vcmp.eq.s32.totalorder %v160, %v200
      %vm483 = vcmp.eq.s32.totalorder %v160, %v204
      %vm484 = vcmp.eq.s32.totalorder %v160, %v208
      %vm485 = vcmp.eq.s32.totalorder %v161, %v200
      %vm486 = vcmp.eq.s32.totalorder %v161, %v204
      %vm487 = vcmp.eq.s32.totalorder %v161, %v208
      %vm488 = vcmp.eq.s32.totalorder %v162, %v200
      %vm489 = vcmp.eq.s32.totalorder %v162, %v204
      %vm490 = vcmp.eq.s32.totalorder %v162, %v208
      %vm491 = vcmp.eq.s32.totalorder %v163, %v200
      %vm492 = vcmp.eq.s32.totalorder %v163, %v204
      %vm493 = vcmp.eq.s32.totalorder %v163, %v208
      %vm494 = vcmp.eq.s32.totalorder %v164, %v200
      %vm495 = vcmp.eq.s32.totalorder %v164, %v204
      %vm496 = vcmp.eq.s32.totalorder %v164, %v208
      %vm497 = vcmp.eq.s32.totalorder %v165, %v200
      %vm498 = vcmp.eq.s32.totalorder %v165, %v204
      %vm499 = vcmp.eq.s32.totalorder %v165, %v208
      %vm500 = vcmp.eq.s32.totalorder %v166, %v200
      %vm501 = vcmp.eq.s32.totalorder %v166, %v204
      %vm502 = vcmp.eq.s32.totalorder %v166, %v208
      %vm503 = vcmp.eq.s32.totalorder %v167, %v200
      %vm504 = vcmp.eq.s32.totalorder %v167, %v204
      %vm505 = vcmp.eq.s32.totalorder %v167, %v208
      %vm506 = vcmp.eq.s32.totalorder %v168, %v200
      %vm507 = vcmp.eq.s32.totalorder %v168, %v204
      %vm508 = vcmp.eq.s32.totalorder %v168, %v208
      %vm509 = vcmp.eq.s32.totalorder %v169, %v200
      %vm510 = vcmp.eq.s32.totalorder %v169, %v204
      %vm511 = vcmp.eq.s32.totalorder %v169, %v208
      %vm512 = vcmp.eq.s32.totalorder %v170, %v200
      %vm513 = vcmp.eq.s32.totalorder %v170, %v204
      %vm514 = vcmp.eq.s32.totalorder %v170, %v208
      %vm515 = vcmp.eq.s32.totalorder %v171, %v200
      %vm516 = vcmp.eq.s32.totalorder %v171, %v204
      %vm517 = vcmp.eq.s32.totalorder %v171, %v208
      %vm518 = vcmp.eq.s32.totalorder %v172, %v200
      %vm519 = vcmp.eq.s32.totalorder %v172, %v204
      %vm520 = vcmp.eq.s32.totalorder %v172, %v208
      %vm521 = vcmp.eq.s32.totalorder %v173, %v200
      %vm522 = vcmp.eq.s32.totalorder %v173, %v204
      %vm523 = vcmp.eq.s32.totalorder %v173, %v208
      %vm524 = vcmp.eq.s32.totalorder %v174, %v200
      %vm525 = vcmp.eq.s32.totalorder %v174, %v204
      %vm526 = vcmp.eq.s32.totalorder %v174, %v208
      %vm527 = vcmp.eq.s32.totalorder %v175, %v200
      %vm528 = vcmp.eq.s32.totalorder %v175, %v204
      %vm529 = vcmp.eq.s32.totalorder %v175, %v208
      %vm530 = vcmp.eq.s32.totalorder %v176, %v200
      %vm531 = vcmp.eq.s32.totalorder %v176, %v204
      %vm532 = vcmp.eq.s32.totalorder %v176, %v208
      %vm533 = vcmp.eq.s32.totalorder %v177, %v200
      %vm534 = vcmp.eq.s32.totalorder %v177, %v204
      %vm535 = vcmp.eq.s32.totalorder %v177, %v208
      %vm536 = vcmp.eq.s32.totalorder %v178, %v200
      %vm537 = vcmp.eq.s32.totalorder %v178, %v204
      %vm538 = vcmp.eq.s32.totalorder %v178, %v208
      %vm539 = vcmp.eq.s32.totalorder %v179, %v200
      %vm540 = vcmp.eq.s32.totalorder %v179, %v204
      %vm541 = vcmp.eq.s32.totalorder %v179, %v208
      %vm542 = vcmp.eq.s32.totalorder %v180, %v200
      %vm543 = vcmp.eq.s32.totalorder %v180, %v204
      %vm544 = vcmp.eq.s32.totalorder %v180, %v208
      %vm545 = vcmp.eq.s32.totalorder %v181, %v200
      %vm546 = vcmp.eq.s32.totalorder %v181, %v204
      %vm547 = vcmp.eq.s32.totalorder %v181, %v208
      %vm548 = vcmp.eq.s32.totalorder %v182, %v200
      %vm549 = vcmp.eq.s32.totalorder %v182, %v204
      %vm550 = vcmp.eq.s32.totalorder %v182, %v208
      %vm551 = vcmp.eq.s32.totalorder %v183, %v200
      %vm552 = vcmp.eq.s32.totalorder %v183, %v204
      %vm553 = vcmp.eq.s32.totalorder %v183, %v208
      %vm554 = vcmp.eq.s32.totalorder %v184, %v200
      %vm555 = vcmp.eq.s32.totalorder %v184, %v204
      %vm556 = vcmp.eq.s32.totalorder %v184, %v208
      %vm557 = vcmp.eq.s32.totalorder %v185, %v200
      %vm558 = vcmp.eq.s32.totalorder %v185, %v204
      %vm559 = vcmp.eq.s32.totalorder %v185, %v208
      %vm560 = vcmp.eq.s32.totalorder %v186, %v200
      %vm561 = vcmp.eq.s32.totalorder %v186, %v204
      %vm562 = vcmp.eq.s32.totalorder %v186, %v208
      %vm563 = vcmp.eq.s32.totalorder %v187, %v200
      %vm564 = vcmp.eq.s32.totalorder %v187, %v204
      %vm565 = vcmp.eq.s32.totalorder %v187, %v208
      %vm566 = vcmp.eq.s32.totalorder %v188, %v200
      %vm567 = vcmp.eq.s32.totalorder %v188, %v204
      %vm568 = vcmp.eq.s32.totalorder %v188, %v208
      %vm569 = vcmp.eq.s32.totalorder %v189, %v200
      %vm570 = vcmp.eq.s32.totalorder %v189, %v204
      %vm571 = vcmp.eq.s32.totalorder %v189, %v208
      %vm572 = vcmp.eq.s32.totalorder %v190, %v200
      %vm573 = vcmp.eq.s32.totalorder %v190, %v204
      %vm574 = vcmp.eq.s32.totalorder %v190, %v208
      %vm575 = vcmp.eq.s32.totalorder %v191, %v200
      %vm576 = vcmp.eq.s32.totalorder %v191, %v204
      %vm577 = vcmp.eq.s32.totalorder %v191, %v208
      %vm578 = vcmp.eq.s32.totalorder %v192, %v200
      %vm579 = vcmp.eq.s32.totalorder %v192, %v204
      %vm580 = vcmp.eq.s32.totalorder %v192, %v208
      %vm581 = vcmp.eq.s32.totalorder %v193, %v200
      %vm582 = vcmp.eq.s32.totalorder %v193, %v204
      %vm583 = vcmp.eq.s32.totalorder %v193, %v208
      %vm584 = vcmp.eq.s32.totalorder %v194, %v200
      %vm585 = vcmp.eq.s32.totalorder %v194, %v204
      %vm586 = vcmp.eq.s32.totalorder %v194, %v208
      %vm587 = vcmp.eq.s32.totalorder %v195, %v200
      %vm588 = vcmp.eq.s32.totalorder %v195, %v204
      %vm589 = vcmp.eq.s32.totalorder %v195, %v208
      %vm590 = vcmp.eq.s32.totalorder %v196, %v200
      %vm591 = vcmp.eq.s32.totalorder %v196, %v204
      %vm592 = vcmp.eq.s32.totalorder %v196, %v208
      %v593 = vsel %vm209, 1, 0
      %v594 = vsel %vm210, 1, 0
      %v595 = vsel %vm211, 1, 0
      %v596 = vsel %vm212, 1, 0
      %v597 = vsel %vm213, 1, 0
      %v598 = vsel %vm214, 1, 0
      %v599 = vsel %vm215, 1, 0
      %v600 = vsel %vm216, 1, 0
      %v601 = vsel %vm217, 1, 0
      %v602 = vsel %vm218, 1, 0
      %v603 = vsel %vm219, 1, 0
      %v604 = vsel %vm220, 1, 0
      %v605 = vsel %vm221, 1, 0
      %v606 = vsel %vm222, 1, 0
      %v607 = vsel %vm223, 1, 0
      %v608 = vsel %vm224, 1, 0
      %v609 = vsel %vm225, 1, 0
      %v610 = vsel %vm226, 1, 0
      %v611 = vsel %vm227, 1, 0
      %v612 = vsel %vm228, 1, 0
      %v613 = vsel %vm229, 1, 0
      %v614 = vsel %vm230, 1, 0
      %v615 = vsel %vm231, 1, 0
      %v616 = vsel %vm232, 1, 0
      %v617 = vsel %vm233, 1, 0
      %v618 = vsel %vm234, 1, 0
      %v619 = vsel %vm235, 1, 0
      %v620 = vsel %vm236, 1, 0
      %v621 = vsel %vm237, 1, 0
      %v622 = vsel %vm238, 1, 0
      %v623 = vsel %vm239, 1, 0
      %v624 = vsel %vm240, 1, 0
      %v625 = vsel %vm241, 1, 0
      %v626 = vsel %vm242, 1, 0
      %v627 = vsel %vm243, 1, 0
      %v628 = vsel %vm244, 1, 0
      %v629 = vsel %vm245, 1, 0
      %v630 = vsel %vm246, 1, 0
      %v631 = vsel %vm247, 1, 0
      %v632 = vsel %vm248, 1, 0
      %v633 = vsel %vm249, 1, 0
      %v634 = vsel %vm250, 1, 0
      %v635 = vsel %vm251, 1, 0
      %v636 = vsel %vm252, 1, 0
      %v637 = vsel %vm253, 1, 0
      %v638 = vsel %vm254, 1, 0
      %v639 = vsel %vm255, 1, 0
      %v640 = vsel %vm256, 1, 0
      %v641 = vsel %vm257, 1, 0
      %v642 = vsel %vm258, 1, 0
      %v643 = vsel %vm259, 1, 0
      %v644 = vsel %vm260, 1, 0
      %v645 = vsel %vm261, 1, 0
      %v646 = vsel %vm262, 1, 0
      %v647 = vsel %vm263, 1, 0
      %v648 = vsel %vm264, 1, 0
      %v649 = vsel %vm265, 1, 0
      %v650 = vsel %vm266, 1, 0
      %v651 = vsel %vm267, 1, 0
      %v652 = vsel %vm268, 1, 0
      %v653 = vsel %vm269, 1, 0
      %v654 = vsel %vm270, 1, 0
      %v655 = vsel %vm271, 1, 0
      %v656 = vsel %vm272, 1, 0
      %v657 = vsel %vm273, 1, 0
      %v658 = vsel %vm274, 1, 0
      %v659 = vsel %vm275, 1, 0
      %v660 = vsel %vm276, 1, 0
      %v661 = vsel %vm277, 1, 0
      %v662 = vsel %vm278, 1, 0
      %v663 = vsel %vm279, 1, 0
      %v664 = vsel %vm280, 1, 0
      %v665 = vsel %vm281, 1, 0
      %v666 = vsel %vm282, 1, 0
      %v667 = vsel %vm283, 1, 0
      %v668 = vsel %vm284, 1, 0
      %v669 = vsel %vm285, 1, 0
      %v670 = vsel %vm286, 1, 0
      %v671 = vsel %vm287, 1, 0
      %v672 = vsel %vm288, 1, 0
      %v673 = vsel %vm289, 1, 0
      %v674 = vsel %vm290, 1, 0
      %v675 = vsel %vm291, 1, 0
      %v676 = vsel %vm292, 1, 0
      %v677 = vsel %vm293, 1, 0
      %v678 = vsel %vm294, 1, 0
      %v679 = vsel %vm295, 1, 0
      %v680 = vsel %vm296, 1, 0
      %v681 = vsel %vm297, 1, 0
      %v682 = vsel %vm298, 1, 0
      %v683 = vsel %vm299, 1, 0
      %v684 = vsel %vm300, 1, 0
      %v685 = vsel %vm301, 1, 0
      %v686 = vsel %vm302, 1, 0
      %v687 = vsel %vm303, 1, 0
      %v688 = vsel %vm304, 1, 0
      %v689 = vsel %vm305, 1, 0
      %v690 = vsel %vm306, 1, 0
      %v691 = vsel %vm307, 1, 0
      %v692 = vsel %vm308, 1, 0
      %v693 = vsel %vm309, 1, 0
      %v694 = vsel %vm310, 1, 0
      %v695 = vsel %vm311, 1, 0
      %v696 = vsel %vm312, 1, 0
      %v697 = vsel %vm313, 1, 0
      %v698 = vsel %vm314, 1, 0
      %v699 = vsel %vm315, 1, 0
      %v700 = vsel %vm316, 1, 0
      %v701 = vsel %vm317, 1, 0
      %v702 = vsel %vm318, 1, 0
      %v703 = vsel %vm319, 1, 0
      %v704 = vsel %vm320, 1, 0
      %v705 = vsel %vm321, 1, 0
      %v706 = vsel %vm322, 1, 0
      %v707 = vsel %vm323, 1, 0
      %v708 = vsel %vm324, 1, 0
      %v709 = vsel %vm325, 1, 0
      %v710 = vsel %vm326, 1, 0
      %v711 = vsel %vm327, 1, 0
      %v712 = vsel %vm328, 1, 0
      %v713 = vsel %vm329, 1, 0
      %v714 = vsel %vm330, 1, 0
      %v715 = vsel %vm331, 1, 0
      %v716 = vsel %vm332, 1, 0
      %v717 = vsel %vm333, 1, 0
      %v718 = vsel %vm334, 1, 0
      %v719 = vsel %vm335, 1, 0
      %v720 = vsel %vm336, 1, 0
      %v721 = vsel %vm337, 1, 0
      %v722 = vsel %vm338, 1, 0
      %v723 = vsel %vm339, 1, 0
      %v724 = vsel %vm340, 1, 0
      %v725 = vsel %vm341, 1, 0
      %v726 = vsel %vm342, 1, 0
      %v727 = vsel %vm343, 1, 0
      %v728 = vsel %vm344, 1, 0
      %v729 = vsel %vm345, 1, 0
      %v730 = vsel %vm346, 1, 0
      %v731 = vsel %vm347, 1, 0
      %v732 = vsel %vm348, 1, 0
      %v733 = vsel %vm349, 1, 0
      %v734 = vsel %vm350, 1, 0
      %v735 = vsel %vm351, 1, 0
      %v736 = vsel %vm352, 1, 0
      %v737 = vsel %vm353, 1, 0
      %v738 = vsel %vm354, 1, 0
      %v739 = vsel %vm355, 1, 0
      %v740 = vsel %vm356, 1, 0
      %v741 = vsel %vm357, 1, 0
      %v742 = vsel %vm358, 1, 0
      %v743 = vsel %vm359, 1, 0
      %v744 = vsel %vm360, 1, 0
      %v745 = vsel %vm361, 1, 0
      %v746 = vsel %vm362, 1, 0
      %v747 = vsel %vm363, 1, 0
      %v748 = vsel %vm364, 1, 0
      %v749 = vsel %vm365, 1, 0
      %v750 = vsel %vm366, 1, 0
      %v751 = vsel %vm367, 1, 0
      %v752 = vsel %vm368, 1, 0
      %v753 = vsel %vm369, 1, 0
      %v754 = vsel %vm370, 1, 0
      %v755 = vsel %vm371, 1, 0
      %v756 = vsel %vm372, 1, 0
      %v757 = vsel %vm373, 1, 0
      %v758 = vsel %vm374, 1, 0
      %v759 = vsel %vm375, 1, 0
      %v760 = vsel %vm376, 1, 0
      %v761 = vsel %vm377, 1, 0
      %v762 = vsel %vm378, 1, 0
      %v763 = vsel %vm379, 1, 0
      %v764 = vsel %vm380, 1, 0
      %v765 = vsel %vm381, 1, 0
      %v766 = vsel %vm382, 1, 0
      %v767 = vsel %vm383, 1, 0
      %v768 = vsel %vm384, 1, 0
      %v769 = vsel %vm385, 1, 0
      %v770 = vsel %vm386, 1, 0
      %v771 = vsel %vm387, 1, 0
      %v772 = vsel %vm388, 1, 0
      %v773 = vsel %vm389, 1, 0
      %v774 = vsel %vm390, 1, 0
      %v775 = vsel %vm391, 1, 0
      %v776 = vsel %vm392, 1, 0
      %v777 = vsel %vm393, 1, 0
      %v778 = vsel %vm394, 1, 0
      %v779 = vsel %vm395, 1, 0
      %v780 = vsel %vm396, 1, 0
      %v781 = vsel %vm397, 1, 0
      %v782 = vsel %vm398, 1, 0
      %v783 = vsel %vm399, 1, 0
      %v784 = vsel %vm400, 1, 0
      %v785 = vsel %vm401, 1, 0
      %v786 = vsel %vm402, 1, 0
      %v787 = vsel %vm403, 1, 0
      %v788 = vsel %vm404, 1, 0
      %v789 = vsel %vm405, 1, 0
      %v790 = vsel %vm406, 1, 0
      %v791 = vsel %vm407, 1, 0
      %v792 = vsel %vm408, 1, 0
      %v793 = vsel %vm409, 1, 0
      %v794 = vsel %vm410, 1, 0
      %v795 = vsel %vm411, 1, 0
      %v796 = vsel %vm412, 1, 0
      %v797 = vsel %vm413, 1, 0
      %v798 = vsel %vm414, 1, 0
      %v799 = vsel %vm415, 1, 0
      %v800 = vsel %vm416, 1, 0
      %v801 = vsel %vm417, 1, 0
      %v802 = vsel %vm418, 1, 0
      %v803 = vsel %vm419, 1, 0
      %v804 = vsel %vm420, 1, 0
      %v805 = vsel %vm421, 1, 0
      %v806 = vsel %vm422, 1, 0
      %v807 = vsel %vm423, 1, 0
      %v808 = vsel %vm424, 1, 0
      %v809 = vsel %vm425, 1, 0
      %v810 = vsel %vm426, 1, 0
      %v811 = vsel %vm427, 1, 0
      %v812 = vsel %vm428, 1, 0
      %v813 = vsel %vm429, 1, 0
      %v814 = vsel %vm430, 1, 0
      %v815 = vsel %vm431, 1, 0
      %v816 = vsel %vm432, 1, 0
      %v817 = vsel %vm433, 1, 0
      %v818 = vsel %vm434, 1, 0
      %v819 = vsel %vm435, 1, 0
      %v820 = vsel %vm436, 1, 0
      %v821 = vsel %vm437, 1, 0
      %v822 = vsel %vm438, 1, 0
      %v823 = vsel %vm439, 1, 0
      %v824 = vsel %vm440, 1, 0
      %v825 = vsel %vm441, 1, 0
      %v826 = vsel %vm442, 1, 0
      %v827 = vsel %vm443, 1, 0
      %v828 = vsel %vm444, 1, 0
      %v829 = vsel %vm445, 1, 0
      %v830 = vsel %vm446, 1, 0
      %v831 = vsel %vm447, 1, 0
      %v832 = vsel %vm448, 1, 0
      %v833 = vsel %vm449, 1, 0
      %v834 = vsel %vm450, 1, 0
      %v835 = vsel %vm451, 1, 0
      %v836 = vsel %vm452, 1, 0
      %v837 = vsel %vm453, 1, 0
      %v838 = vsel %vm454, 1, 0
      %v839 = vsel %vm455, 1, 0
      %v840 = vsel %vm456, 1, 0
      %v841 = vsel %vm457, 1, 0
      %v842 = vsel %vm458, 1, 0
      %v843 = vsel %vm459, 1, 0
      %v844 = vsel %vm460, 1, 0
      %v845 = vsel %vm461, 1, 0
      %v846 = vsel %vm462, 1, 0
      %v847 = vsel %vm463, 1, 0
      %v848 = vsel %vm464, 1, 0
      %v849 = vsel %vm465, 1, 0
      %v850 = vsel %vm466, 1, 0
      %v851 = vsel %vm467, 1, 0
      %v852 = vsel %vm468, 1, 0
      %v853 = vsel %vm469, 1, 0
      %v854 = vsel %vm470, 1, 0
      %v855 = vsel %vm471, 1, 0
      %v856 = vsel %vm472, 1, 0
      %v857 = vsel %vm473, 1, 0
      %v858 = vsel %vm474, 1, 0
      %v859 = vsel %vm475, 1, 0
      %v860 = vsel %vm476, 1, 0
      %v861 = vsel %vm477, 1, 0
      %v862 = vsel %vm478, 1, 0
      %v863 = vsel %vm479, 1, 0
      %v864 = vsel %vm480, 1, 0
      %v865 = vsel %vm481, 1, 0
      %v866 = vsel %vm482, 1, 0
      %v867 = vsel %vm483, 1, 0
      %v868 = vsel %vm484, 1, 0
      %v869 = vsel %vm485, 1, 0
      %v870 = vsel %vm486, 1, 0
      %v871 = vsel %vm487, 1, 0
      %v872 = vsel %vm488, 1, 0
      %v873 = vsel %vm489, 1, 0
      %v874 = vsel %vm490, 1, 0
      %v875 = vsel %vm491, 1, 0
      %v876 = vsel %vm492, 1, 0
      %v877 = vsel %vm493, 1, 0
      %v878 = vsel %vm494, 1, 0
      %v879 = vsel %vm495, 1, 0
      %v880 = vsel %vm496, 1, 0
      %v881 = vsel %vm497, 1, 0
      %v882 = vsel %vm498, 1, 0
      %v883 = vsel %vm499, 1, 0
      %v884 = vsel %vm500, 1, 0
      %v885 = vsel %vm501, 1, 0
      %v886 = vsel %vm502, 1, 0
      %v887 = vsel %vm503, 1, 0
      %v888 = vsel %vm504, 1, 0
      %v889 = vsel %vm505, 1, 0
      %v890 = vsel %vm506, 1, 0
      %v891 = vsel %vm507, 1, 0
      %v892 = vsel %vm508, 1, 0
      %v893 = vsel %vm509, 1, 0
      %v894 = vsel %vm510, 1, 0
      %v895 = vsel %vm511, 1, 0
      %v896 = vsel %vm512, 1, 0
      %v897 = vsel %vm513, 1, 0
      %v898 = vsel %vm514, 1, 0
      %v899 = vsel %vm515, 1, 0
      %v900 = vsel %vm516, 1, 0
      %v901 = vsel %vm517, 1, 0
      %v902 = vsel %vm518, 1, 0
      %v903 = vsel %vm519, 1, 0
      %v904 = vsel %vm520, 1, 0
      %v905 = vsel %vm521, 1, 0
      %v906 = vsel %vm522, 1, 0
      %v907 = vsel %vm523, 1, 0
      %v908 = vsel %vm524, 1, 0
      %v909 = vsel %vm525, 1, 0
      %v910 = vsel %vm526, 1, 0
      %v911 = vsel %vm527, 1, 0
      %v912 = vsel %vm528, 1, 0
      %v913 = vsel %vm529, 1, 0
      %v914 = vsel %vm530, 1, 0
      %v915 = vsel %vm531, 1, 0
      %v916 = vsel %vm532, 1, 0
      %v917 = vsel %vm533, 1, 0
      %v918 = vsel %vm534, 1, 0
      %v919 = vsel %vm535, 1, 0
      %v920 = vsel %vm536, 1, 0
      %v921 = vsel %vm537, 1, 0
      %v922 = vsel %vm538, 1, 0
      %v923 = vsel %vm539, 1, 0
      %v924 = vsel %vm540, 1, 0
      %v925 = vsel %vm541, 1, 0
      %v926 = vsel %vm542, 1, 0
      %v927 = vsel %vm543, 1, 0
      %v928 = vsel %vm544, 1, 0
      %v929 = vsel %vm545, 1, 0
      %v930 = vsel %vm546, 1, 0
      %v931 = vsel %vm547, 1, 0
      %v932 = vsel %vm548, 1, 0
      %v933 = vsel %vm549, 1, 0
      %v934 = vsel %vm550, 1, 0
      %v935 = vsel %vm551, 1, 0
      %v936 = vsel %vm552, 1, 0
      %v937 = vsel %vm553, 1, 0
      %v938 = vsel %vm554, 1, 0
      %v939 = vsel %vm555, 1, 0
      %v940 = vsel %vm556, 1, 0
      %v941 = vsel %vm557, 1, 0
      %v942 = vsel %vm558, 1, 0
      %v943 = vsel %vm559, 1, 0
      %v944 = vsel %vm560, 1, 0
      %v945 = vsel %vm561, 1, 0
      %v946 = vsel %vm562, 1, 0
      %v947 = vsel %vm563, 1, 0
      %v948 = vsel %vm564, 1, 0
      %v949 = vsel %vm565, 1, 0
      %v950 = vsel %vm566, 1, 0
      %v951 = vsel %vm567, 1, 0
      %v952 = vsel %vm568, 1, 0
      %v953 = vsel %vm569, 1, 0
      %v954 = vsel %vm570, 1, 0
      %v955 = vsel %vm571, 1, 0
      %v956 = vsel %vm572, 1, 0
      %v957 = vsel %vm573, 1, 0
      %v958 = vsel %vm574, 1, 0
      %v959 = vsel %vm575, 1, 0
      %v960 = vsel %vm576, 1, 0
      %v961 = vsel %vm577, 1, 0
      %v962 = vsel %vm578, 1, 0
      %v963 = vsel %vm579, 1, 0
      %v964 = vsel %vm580, 1, 0
      %v965 = vsel %vm581, 1, 0
      %v966 = vsel %vm582, 1, 0
      %v967 = vsel %vm583, 1, 0
      %v968 = vsel %vm584, 1, 0
      %v969 = vsel %vm585, 1, 0
      %v970 = vsel %vm586, 1, 0
      %v971 = vsel %vm587, 1, 0
      %v972 = vsel %vm588, 1, 0
      %v973 = vsel %vm589, 1, 0
      %v974 = vsel %vm590, 1, 0
      %v975 = vsel %vm591, 1, 0
      %v976 = vsel %vm592, 1, 0
      %v977 = vcvt.s32.f32 %v593
      %v978 = vcvt.s32.f32 %v594
      %v979 = vcvt.s32.f32 %v595
      %v980 = vcvt.s32.f32 %v596
      %v981 = vcvt.s32.f32 %v597
      %v982 = vcvt.s32.f32 %v598
      %v983 = vcvt.s32.f32 %v599
      %v984 = vcvt.s32.f32 %v600
      %v985 = vcvt.s32.f32 %v601
      %v986 = vcvt.s32.f32 %v602
      %v987 = vcvt.s32.f32 %v603
      %v988 = vcvt.s32.f32 %v604
      %v989 = vcvt.s32.f32 %v605
      %v990 = vcvt.s32.f32 %v606
      %v991 = vcvt.s32.f32 %v607
      %v992 = vcvt.s32.f32 %v608
      %v993 = vcvt.s32.f32 %v609
      %v994 = vcvt.s32.f32 %v610
      %v995 = vcvt.s32.f32 %v611
      %v996 = vcvt.s32.f32 %v612
      %v997 = vcvt.s32.f32 %v613
      %v998 = vcvt.s32.f32 %v614
      %v999 = vcvt.s32.f32 %v615
      %v1000 = vcvt.s32.f32 %v616
      %v1001 = vcvt.s32.f32 %v617
      %v1002 = vcvt.s32.f32 %v618
      %v1003 = vcvt.s32.f32 %v619
      %v1004 = vcvt.s32.f32 %v620
      %v1005 = vcvt.s32.f32 %v621
      %v1006 = vcvt.s32.f32 %v622
      %v1007 = vcvt.s32.f32 %v623
      %v1008 = vcvt.s32.f32 %v624
      %v1009 = vcvt.s32.f32 %v625
      %v1010 = vcvt.s32.f32 %v626
      %v1011 = vcvt.s32.f32 %v627
      %v1012 = vcvt.s32.f32 %v628
      %v1013 = vcvt.s32.f32 %v629
      %v1014 = vcvt.s32.f32 %v630
      %v1015 = vcvt.s32.f32 %v631
      %v1016 = vcvt.s32.f32 %v632
      %v1017 = vcvt.s32.f32 %v633
      %v1018 = vcvt.s32.f32 %v634
      %v1019 = vcvt.s32.f32 %v635
      %v1020 = vcvt.s32.f32 %v636
      %v1021 = vcvt.s32.f32 %v637
      %v1022 = vcvt.s32.f32 %v638
      %v1023 = vcvt.s32.f32 %v639
      %v1024 = vcvt.s32.f32 %v640
      %v1025 = vcvt.s32.f32 %v641
      %v1026 = vcvt.s32.f32 %v642
      %v1027 = vcvt.s32.f32 %v643
      %v1028 = vcvt.s32.f32 %v644
      %v1029 = vcvt.s32.f32 %v645
      %v1030 = vcvt.s32.f32 %v646
      %v1031 = vcvt.s32.f32 %v647
      %v1032 = vcvt.s32.f32 %v648
      %v1033 = vcvt.s32.f32 %v649
      %v1034 = vcvt.s32.f32 %v650
      %v1035 = vcvt.s32.f32 %v651
      %v1036 = vcvt.s32.f32 %v652
      %v1037 = vcvt.s32.f32 %v653
      %v1038 = vcvt.s32.f32 %v654
      %v1039 = vcvt.s32.f32 %v655
      %v1040 = vcvt.s32.f32 %v656
      %v1041 = vcvt.s32.f32 %v657
      %v1042 = vcvt.s32.f32 %v658
      %v1043 = vcvt.s32.f32 %v659
      %v1044 = vcvt.s32.f32 %v660
      %v1045 = vcvt.s32.f32 %v661
      %v1046 = vcvt.s32.f32 %v662
      %v1047 = vcvt.s32.f32 %v663
      %v1048 = vcvt.s32.f32 %v664
      %v1049 = vcvt.s32.f32 %v665
      %v1050 = vcvt.s32.f32 %v666
      %v1051 = vcvt.s32.f32 %v667
      %v1052 = vcvt.s32.f32 %v668
      %v1053 = vcvt.s32.f32 %v669
      %v1054 = vcvt.s32.f32 %v670
      %v1055 = vcvt.s32.f32 %v671
      %v1056 = vcvt.s32.f32 %v672
      %v1057 = vcvt.s32.f32 %v673
      %v1058 = vcvt.s32.f32 %v674
      %v1059 = vcvt.s32.f32 %v675
      %v1060 = vcvt.s32.f32 %v676
      %v1061 = vcvt.s32.f32 %v677
      %v1062 = vcvt.s32.f32 %v678
      %v1063 = vcvt.s32.f32 %v679
      %v1064 = vcvt.s32.f32 %v680
      %v1065 = vcvt.s32.f32 %v681
      %v1066 = vcvt.s32.f32 %v682
      %v1067 = vcvt.s32.f32 %v683
      %v1068 = vcvt.s32.f32 %v684
      %v1069 = vcvt.s32.f32 %v685
      %v1070 = vcvt.s32.f32 %v686
      %v1071 = vcvt.s32.f32 %v687
      %v1072 = vcvt.s32.f32 %v688
      %v1073 = vcvt.s32.f32 %v689
      %v1074 = vcvt.s32.f32 %v690
      %v1075 = vcvt.s32.f32 %v691
      %v1076 = vcvt.s32.f32 %v692
      %v1077 = vcvt.s32.f32 %v693
      %v1078 = vcvt.s32.f32 %v694
      %v1079 = vcvt.s32.f32 %v695
      %v1080 = vcvt.s32.f32 %v696
      %v1081 = vcvt.s32.f32 %v697
      %v1082 = vcvt.s32.f32 %v698
      %v1083 = vcvt.s32.f32 %v699
      %v1084 = vcvt.s32.f32 %v700
      %v1085 = vcvt.s32.f32 %v701
      %v1086 = vcvt.s32.f32 %v702
      %v1087 = vcvt.s32.f32 %v703
      %v1088 = vcvt.s32.f32 %v704
      %v1089 = vcvt.s32.f32 %v705
      %v1090 = vcvt.s32.f32 %v706
      %v1091 = vcvt.s32.f32 %v707
      %v1092 = vcvt.s32.f32 %v708
      %v1093 = vcvt.s32.f32 %v709
      %v1094 = vcvt.s32.f32 %v710
      %v1095 = vcvt.s32.f32 %v711
      %v1096 = vcvt.s32.f32 %v712
      %v1097 = vcvt.s32.f32 %v713
      %v1098 = vcvt.s32.f32 %v714
      %v1099 = vcvt.s32.f32 %v715
      %v1100 = vcvt.s32.f32 %v716
      %v1101 = vcvt.s32.f32 %v717
      %v1102 = vcvt.s32.f32 %v718
      %v1103 = vcvt.s32.f32 %v719
      %v1104 = vcvt.s32.f32 %v720
      %v1105 = vcvt.s32.f32 %v721
      %v1106 = vcvt.s32.f32 %v722
      %v1107 = vcvt.s32.f32 %v723
      %v1108 = vcvt.s32.f32 %v724
      %v1109 = vcvt.s32.f32 %v725
      %v1110 = vcvt.s32.f32 %v726
      %v1111 = vcvt.s32.f32 %v727
      %v1112 = vcvt.s32.f32 %v728
      %v1113 = vcvt.s32.f32 %v729
      %v1114 = vcvt.s32.f32 %v730
      %v1115 = vcvt.s32.f32 %v731
      %v1116 = vcvt.s32.f32 %v732
      %v1117 = vcvt.s32.f32 %v733
      %v1118 = vcvt.s32.f32 %v734
      %v1119 = vcvt.s32.f32 %v735
      %v1120 = vcvt.s32.f32 %v736
      %v1121 = vcvt.s32.f32 %v737
      %v1122 = vcvt.s32.f32 %v738
      %v1123 = vcvt.s32.f32 %v739
      %v1124 = vcvt.s32.f32 %v740
      %v1125 = vcvt.s32.f32 %v741
      %v1126 = vcvt.s32.f32 %v742
      %v1127 = vcvt.s32.f32 %v743
      %v1128 = vcvt.s32.f32 %v744
      %v1129 = vcvt.s32.f32 %v745
      %v1130 = vcvt.s32.f32 %v746
      %v1131 = vcvt.s32.f32 %v747
      %v1132 = vcvt.s32.f32 %v748
      %v1133 = vcvt.s32.f32 %v749
      %v1134 = vcvt.s32.f32 %v750
      %v1135 = vcvt.s32.f32 %v751
      %v1136 = vcvt.s32.f32 %v752
      %v1137 = vcvt.s32.f32 %v753
      %v1138 = vcvt.s32.f32 %v754
      %v1139 = vcvt.s32.f32 %v755
      %v1140 = vcvt.s32.f32 %v756
      %v1141 = vcvt.s32.f32 %v757
      %v1142 = vcvt.s32.f32 %v758
      %v1143 = vcvt.s32.f32 %v759
      %v1144 = vcvt.s32.f32 %v760
      %v1145 = vcvt.s32.f32 %v761
      %v1146 = vcvt.s32.f32 %v762
      %v1147 = vcvt.s32.f32 %v763
      %v1148 = vcvt.s32.f32 %v764
      %v1149 = vcvt.s32.f32 %v765
      %v1150 = vcvt.s32.f32 %v766
      %v1151 = vcvt.s32.f32 %v767
      %v1152 = vcvt.s32.f32 %v768
      %v1153 = vcvt.s32.f32 %v769
      %v1154 = vcvt.s32.f32 %v770
      %v1155 = vcvt.s32.f32 %v771
      %v1156 = vcvt.s32.f32 %v772
      %v1157 = vcvt.s32.f32 %v773
      %v1158 = vcvt.s32.f32 %v774
      %v1159 = vcvt.s32.f32 %v775
      %v1160 = vcvt.s32.f32 %v776
      %v1161 = vcvt.s32.f32 %v777
      %v1162 = vcvt.s32.f32 %v778
      %v1163 = vcvt.s32.f32 %v779
      %v1164 = vcvt.s32.f32 %v780
      %v1165 = vcvt.s32.f32 %v781
      %v1166 = vcvt.s32.f32 %v782
      %v1167 = vcvt.s32.f32 %v783
      %v1168 = vcvt.s32.f32 %v784
      %v1169 = vcvt.s32.f32 %v785
      %v1170 = vcvt.s32.f32 %v786
      %v1171 = vcvt.s32.f32 %v787
      %v1172 = vcvt.s32.f32 %v788
      %v1173 = vcvt.s32.f32 %v789
      %v1174 = vcvt.s32.f32 %v790
      %v1175 = vcvt.s32.f32 %v791
      %v1176 = vcvt.s32.f32 %v792
      %v1177 = vcvt.s32.f32 %v793
      %v1178 = vcvt.s32.f32 %v794
      %v1179 = vcvt.s32.f32 %v795
      %v1180 = vcvt.s32.f32 %v796
      %v1181 = vcvt.s32.f32 %v797
      %v1182 = vcvt.s32.f32 %v798
      %v1183 = vcvt.s32.f32 %v799
      %v1184 = vcvt.s32.f32 %v800
      %v1185 = vcvt.s32.f32 %v801
      %v1186 = vcvt.s32.f32 %v802
      %v1187 = vcvt.s32.f32 %v803
      %v1188 = vcvt.s32.f32 %v804
      %v1189 = vcvt.s32.f32 %v805
      %v1190 = vcvt.s32.f32 %v806
      %v1191 = vcvt.s32.f32 %v807
      %v1192 = vcvt.s32.f32 %v808
      %v1193 = vcvt.s32.f32 %v809
      %v1194 = vcvt.s32.f32 %v810
      %v1195 = vcvt.s32.f32 %v811
      %v1196 = vcvt.s32.f32 %v812
      %v1197 = vcvt.s32.f32 %v813
      %v1198 = vcvt.s32.f32 %v814
      %v1199 = vcvt.s32.f32 %v815
      %v1200 = vcvt.s32.f32 %v816
      %v1201 = vcvt.s32.f32 %v817
      %v1202 = vcvt.s32.f32 %v818
      %v1203 = vcvt.s32.f32 %v819
      %v1204 = vcvt.s32.f32 %v820
      %v1205 = vcvt.s32.f32 %v821
      %v1206 = vcvt.s32.f32 %v822
      %v1207 = vcvt.s32.f32 %v823
      %v1208 = vcvt.s32.f32 %v824
      %v1209 = vcvt.s32.f32 %v825
      %v1210 = vcvt.s32.f32 %v826
      %v1211 = vcvt.s32.f32 %v827
      %v1212 = vcvt.s32.f32 %v828
      %v1213 = vcvt.s32.f32 %v829
      %v1214 = vcvt.s32.f32 %v830
      %v1215 = vcvt.s32.f32 %v831
      %v1216 = vcvt.s32.f32 %v832
      %v1217 = vcvt.s32.f32 %v833
      %v1218 = vcvt.s32.f32 %v834
      %v1219 = vcvt.s32.f32 %v835
      %v1220 = vcvt.s32.f32 %v836
      %v1221 = vcvt.s32.f32 %v837
      %v1222 = vcvt.s32.f32 %v838
      %v1223 = vcvt.s32.f32 %v839
      %v1224 = vcvt.s32.f32 %v840
      %v1225 = vcvt.s32.f32 %v841
      %v1226 = vcvt.s32.f32 %v842
      %v1227 = vcvt.s32.f32 %v843
      %v1228 = vcvt.s32.f32 %v844
      %v1229 = vcvt.s32.f32 %v845
      %v1230 = vcvt.s32.f32 %v846
      %v1231 = vcvt.s32.f32 %v847
      %v1232 = vcvt.s32.f32 %v848
      %v1233 = vcvt.s32.f32 %v849
      %v1234 = vcvt.s32.f32 %v850
      %v1235 = vcvt.s32.f32 %v851
      %v1236 = vcvt.s32.f32 %v852
      %v1237 = vcvt.s32.f32 %v853
      %v1238 = vcvt.s32.f32 %v854
      %v1239 = vcvt.s32.f32 %v855
      %v1240 = vcvt.s32.f32 %v856
      %v1241 = vcvt.s32.f32 %v857
      %v1242 = vcvt.s32.f32 %v858
      %v1243 = vcvt.s32.f32 %v859
      %v1244 = vcvt.s32.f32 %v860
      %v1245 = vcvt.s32.f32 %v861
      %v1246 = vcvt.s32.f32 %v862
      %v1247 = vcvt.s32.f32 %v863
      %v1248 = vcvt.s32.f32 %v864
      %v1249 = vcvt.s32.f32 %v865
      %v1250 = vcvt.s32.f32 %v866
      %v1251 = vcvt.s32.f32 %v867
      %v1252 = vcvt.s32.f32 %v868
      %v1253 = vcvt.s32.f32 %v869
      %v1254 = vcvt.s32.f32 %v870
      %v1255 = vcvt.s32.f32 %v871
      %v1256 = vcvt.s32.f32 %v872
      %v1257 = vcvt.s32.f32 %v873
      %v1258 = vcvt.s32.f32 %v874
      %v1259 = vcvt.s32.f32 %v875
      %v1260 = vcvt.s32.f32 %v876
      %v1261 = vcvt.s32.f32 %v877
      %v1262 = vcvt.s32.f32 %v878
      %v1263 = vcvt.s32.f32 %v879
      %v1264 = vcvt.s32.f32 %v880
      %v1265 = vcvt.s32.f32 %v881
      %v1266 = vcvt.s32.f32 %v882
      %v1267 = vcvt.s32.f32 %v883
      %v1268 = vcvt.s32.f32 %v884
      %v1269 = vcvt.s32.f32 %v885
      %v1270 = vcvt.s32.f32 %v886
      %v1271 = vcvt.s32.f32 %v887
      %v1272 = vcvt.s32.f32 %v888
      %v1273 = vcvt.s32.f32 %v889
      %v1274 = vcvt.s32.f32 %v890
      %v1275 = vcvt.s32.f32 %v891
      %v1276 = vcvt.s32.f32 %v892
      %v1277 = vcvt.s32.f32 %v893
      %v1278 = vcvt.s32.f32 %v894
      %v1279 = vcvt.s32.f32 %v895
      %v1280 = vcvt.s32.f32 %v896
      %v1281 = vcvt.s32.f32 %v897
      %v1282 = vcvt.s32.f32 %v898
      %v1283 = vcvt.s32.f32 %v899
      %v1284 = vcvt.s32.f32 %v900
      %v1285 = vcvt.s32.f32 %v901
      %v1286 = vcvt.s32.f32 %v902
      %v1287 = vcvt.s32.f32 %v903
      %v1288 = vcvt.s32.f32 %v904
      %v1289 = vcvt.s32.f32 %v905
      %v1290 = vcvt.s32.f32 %v906
      %v1291 = vcvt.s32.f32 %v907
      %v1292 = vcvt.s32.f32 %v908
      %v1293 = vcvt.s32.f32 %v909
      %v1294 = vcvt.s32.f32 %v910
      %v1295 = vcvt.s32.f32 %v911
      %v1296 = vcvt.s32.f32 %v912
      %v1297 = vcvt.s32.f32 %v913
      %v1298 = vcvt.s32.f32 %v914
      %v1299 = vcvt.s32.f32 %v915
      %v1300 = vcvt.s32.f32 %v916
      %v1301 = vcvt.s32.f32 %v917
      %v1302 = vcvt.s32.f32 %v918
      %v1303 = vcvt.s32.f32 %v919
      %v1304 = vcvt.s32.f32 %v920
      %v1305 = vcvt.s32.f32 %v921
      %v1306 = vcvt.s32.f32 %v922
      %v1307 = vcvt.s32.f32 %v923
      %v1308 = vcvt.s32.f32 %v924
      %v1309 = vcvt.s32.f32 %v925
      %v1310 = vcvt.s32.f32 %v926
      %v1311 = vcvt.s32.f32 %v927
      %v1312 = vcvt.s32.f32 %v928
      %v1313 = vcvt.s32.f32 %v929
      %v1314 = vcvt.s32.f32 %v930
      %v1315 = vcvt.s32.f32 %v931
      %v1316 = vcvt.s32.f32 %v932
      %v1317 = vcvt.s32.f32 %v933
      %v1318 = vcvt.s32.f32 %v934
      %v1319 = vcvt.s32.f32 %v935
      %v1320 = vcvt.s32.f32 %v936
      %v1321 = vcvt.s32.f32 %v937
      %v1322 = vcvt.s32.f32 %v938
      %v1323 = vcvt.s32.f32 %v939
      %v1324 = vcvt.s32.f32 %v940
      %v1325 = vcvt.s32.f32 %v941
      %v1326 = vcvt.s32.f32 %v942
      %v1327 = vcvt.s32.f32 %v943
      %v1328 = vcvt.s32.f32 %v944
      %v1329 = vcvt.s32.f32 %v945
      %v1330 = vcvt.s32.f32 %v946
      %v1331 = vcvt.s32.f32 %v947
      %v1332 = vcvt.s32.f32 %v948
      %v1333 = vcvt.s32.f32 %v949
      %v1334 = vcvt.s32.f32 %v950
      %v1335 = vcvt.s32.f32 %v951
      %v1336 = vcvt.s32.f32 %v952
      %v1337 = vcvt.s32.f32 %v953
      %v1338 = vcvt.s32.f32 %v954
      %v1339 = vcvt.s32.f32 %v955
      %v1340 = vcvt.s32.f32 %v956
      %v1341 = vcvt.s32.f32 %v957
      %v1342 = vcvt.s32.f32 %v958
      %v1343 = vcvt.s32.f32 %v959
      %v1344 = vcvt.s32.f32 %v960
      %v1345 = vcvt.s32.f32 %v961
      %v1346 = vcvt.s32.f32 %v962
      %v1347 = vcvt.s32.f32 %v963
      %v1348 = vcvt.s32.f32 %v964
      %v1349 = vcvt.s32.f32 %v965
      %v1350 = vcvt.s32.f32 %v966
      %v1351 = vcvt.s32.f32 %v967
      %v1352 = vcvt.s32.f32 %v968
      %v1353 = vcvt.s32.f32 %v969
      %v1354 = vcvt.s32.f32 %v970
      %v1355 = vcvt.s32.f32 %v971
      %v1356 = vcvt.s32.f32 %v972
      %v1357 = vcvt.s32.f32 %v973
      %v1358 = vcvt.s32.f32 %v974
      %v1359 = vcvt.s32.f32 %v975
      %v1360 = vcvt.s32.f32 %v976
      %v1361 = vld [vmem:[#allocation2] sm:$0xff]
      %v1362 = vld [vmem:[#allocation2 + $0x8] sm:$0xff]
      %v1363 = vld [vmem:[#allocation2 + $0x10] sm:$0xff]
      %1364 = vmatprep.subr.mxu0 %v1023
      %1365 = vmatpush1.msra.mxu0 %v1022
      %1366 = vmatprep.subr.mxu0 %v1020
      %1367 = vmatpush1.msra.mxu0 %v1019
      %1368 = vmatprep.subr.mxu0 %v1017
      %1369 = vmatpush1.msra.mxu0 %v1016
      %1370 = vmatprep.subr.mxu0 %v1014
      %1371 = vmatpush1.msra.mxu0 %v1013
      %1372 = vmatprep.subr.mxu0 %v1011
      %1373 = vmatpush1.msra.mxu0 %v1010
      %1374 = vmatprep.subr.mxu0 %v1008
      %1375 = vmatpush1.msra.mxu0 %v1007
      %1376 = vmatprep.subr.mxu0 %v1005
      %1377 = vmatpush1.msra.mxu0 %v1004
      %1378 = vmatprep.subr.mxu0 %v1002
      %1379 = vmatpush1.msra.mxu0 %v1001
      %1380 = vmatprep.subr.mxu0 %v999
      %1381 = vmatpush1.msra.mxu0 %v998
      %1382 = vmatprep.subr.mxu0 %v996
      %1383 = vmatpush1.msra.mxu0 %v995
      %1384 = vmatprep.subr.mxu0 %v993
      %1385 = vmatpush1.msra.mxu0 %v992
      %1386 = vmatprep.subr.mxu0 %v990
      %1387 = vmatpush1.msra.mxu0 %v989
      %1388 = vmatprep.subr.mxu0 %v987
      %1389 = vmatpush1.msra.mxu0 %v986
      %1390 = vmatprep.subr.mxu0 %v984
      %1391 = vmatpush1.msra.mxu0 %v983
      %1392 = vmatprep.subr.mxu0 %v981
      %1393 = vmatpush1.msra.mxu0 %v980
      %1394 = vmatprep.subr.mxu0 %v978
      %1395 = vmatpush1.msra.mxu0 %v977
      %1396 = vmatprep.subr.mxu0 %v1071
      %1397 = vmatpush2.msra.mxu0 %v1070
      %1398 = vmatprep.subr.mxu0 %v1068
      %1399 = vmatpush2.msra.mxu0 %v1067
      %1400 = vmatprep.subr.mxu0 %v1065
      %1401 = vmatpush2.msra.mxu0 %v1064
      %1402 = vmatprep.subr.mxu0 %v1062
      %1403 = vmatpush2.msra.mxu0 %v1061
      %1404 = vmatprep.subr.mxu0 %v1059
      %1405 = vmatpush2.msra.mxu0 %v1058
      %1406 = vmatprep.subr.mxu0 %v1056
      %1407 = vmatpush2.msra.mxu0 %v1055
      %1408 = vmatprep.subr.mxu0 %v1053
      %1409 = vmatpush2.msra.mxu0 %v1052
      %1410 = vmatprep.subr.mxu0 %v1050
      %1411 = vmatpush2.msra.mxu0 %v1049
      %1412 = vmatprep.subr.mxu0 %v1047
      %1413 = vmatpush2.msra.mxu0 %v1046
      %1414 = vmatprep.subr.mxu0 %v1044
      %1415 = vmatpush2.msra.mxu0 %v1043
      %1416 = vmatprep.subr.mxu0 %v1041
      %1417 = vmatpush2.msra.mxu0 %v1040
      %1418 = vmatprep.subr.mxu0 %v1038
      %1419 = vmatpush2.msra.mxu0 %v1037
      %1420 = vmatprep.subr.mxu0 %v1035
      %1421 = vmatpush2.msra.mxu0 %v1034
      %1422 = vmatprep.subr.mxu0 %v1032
      %1423 = vmatpush2.msra.mxu0 %v1031
      %1424 = vmatprep.subr.mxu0 %v1029
      %1425 = vmatpush2.msra.mxu0 %v1028
      %1426 = vmatprep.subr.mxu0 %v1026
      %1427 = vmatpush2.msra.mxu0 %v1025
      %1428 = vmatprep.mubr.f32.mxu0 %v58
      %1429 = vmatmul.mubr.f32.gmra.mxu0 %v57
      %v1430 = vpop.f32.mrf.mxu0
      %v1431 = vadd.f32 0.0, %v1430
      %v1432 = vpop.f32.mrf.mxu0
      %v1433 = vadd.f32 0.0, %v1432
      %1434 = vdwg.mxu0
      %1435 = vmatprep.subr.mxu0 %v1119
      %1436 = vmatpush1.msra.mxu0 %v1118
      %1437 = vmatprep.subr.mxu0 %v1116
      %1438 = vmatpush1.msra.mxu0 %v1115
      %1439 = vmatprep.subr.mxu0 %v1113
      %1440 = vmatpush1.msra.mxu0 %v1112
      %1441 = vmatprep.subr.mxu0 %v1110
      %1442 = vmatpush1.msra.mxu0 %v1109
      %1443 = vmatprep.subr.mxu0 %v1107
      %1444 = vmatpush1.msra.mxu0 %v1106
      %1445 = vmatprep.subr.mxu0 %v1104
      %1446 = vmatpush1.msra.mxu0 %v1103
      %1447 = vmatprep.subr.mxu0 %v1101
      %1448 = vmatpush1.msra.mxu0 %v1100
      %1449 = vmatprep.subr.mxu0 %v1098
      %1450 = vmatpush1.msra.mxu0 %v1097
      %1451 = vmatprep.subr.mxu0 %v1095
      %1452 = vmatpush1.msra.mxu0 %v1094
      %1453 = vmatprep.subr.mxu0 %v1092
      %1454 = vmatpush1.msra.mxu0 %v1091
      %1455 = vmatprep.subr.mxu0 %v1089
      %1456 = vmatpush1.msra.mxu0 %v1088
      %1457 = vmatprep.subr.mxu0 %v1086
      %1458 = vmatpush1.msra.mxu0 %v1085
      %1459 = vmatprep.subr.mxu0 %v1083
      %1460 = vmatpush1.msra.mxu0 %v1082
      %1461 = vmatprep.subr.mxu0 %v1080
      %1462 = vmatpush1.msra.mxu0 %v1079
      %1463 = vmatprep.subr.mxu0 %v1077
      %1464 = vmatpush1.msra.mxu0 %v1076
      %1465 = vmatprep.subr.mxu0 %v1074
      %1466 = vmatpush1.msra.mxu0 %v1073
      %1467 = vmatprep.subr.mxu0 %v1167
      %1468 = vmatpush2.msra.mxu0 %v1166
      %1469 = vmatprep.subr.mxu0 %v1164
      %1470 = vmatpush2.msra.mxu0 %v1163
      %1471 = vmatprep.subr.mxu0 %v1161
      %1472 = vmatpush2.msra.mxu0 %v1160
      %1473 = vmatprep.subr.mxu0 %v1158
      %1474 = vmatpush2.msra.mxu0 %v1157
      %1475 = vmatprep.subr.mxu0 %v1155
      %1476 = vmatpush2.msra.mxu0 %v1154
      %1477 = vmatprep.subr.mxu0 %v1152
      %1478 = vmatpush2.msra.mxu0 %v1151
      %1479 = vmatprep.subr.mxu0 %v1149
      %1480 = vmatpush2.msra.mxu0 %v1148
      %1481 = vmatprep.subr.mxu0 %v1146
      %1482 = vmatpush2.msra.mxu0 %v1145
      %1483 = vmatprep.subr.mxu0 %v1143
      %1484 = vmatpush2.msra.mxu0 %v1142
      %1485 = vmatprep.subr.mxu0 %v1140
      %1486 = vmatpush2.msra.mxu0 %v1139
      %1487 = vmatprep.subr.mxu0 %v1137
      %1488 = vmatpush2.msra.mxu0 %v1136
      %1489 = vmatprep.subr.mxu0 %v1134
      %1490 = vmatpush2.msra.mxu0 %v1133
      %1491 = vmatprep.subr.mxu0 %v1131
      %1492 = vmatpush2.msra.mxu0 %v1130
      %1493 = vmatprep.subr.mxu0 %v1128
      %1494 = vmatpush2.msra.mxu0 %v1127
      %1495 = vmatprep.subr.mxu0 %v1125
      %1496 = vmatpush2.msra.mxu0 %v1124
      %1497 = vmatprep.subr.mxu0 %v1122
      %1498 = vmatpush2.msra.mxu0 %v1121
      %1499 = vmatprep.mubr.f32.mxu0 %v60
      %1500 = vmatmul.mubr.f32.gmra.mxu0 %v59
      %v1501 = vpop.f32.mrf.mxu0
      %v1502 = vadd.f32 %v1431, %v1501
      %v1503 = vpop.f32.mrf.mxu0
      %v1504 = vadd.f32 %v1433, %v1503
      %1505 = vdwg.mxu0
      %1506 = vmatprep.subr.mxu0 %v1215
      %1507 = vmatpush1.msra.mxu0 %v1214
      %1508 = vmatprep.subr.mxu0 %v1212
      %1509 = vmatpush1.msra.mxu0 %v1211
      %1510 = vmatprep.subr.mxu0 %v1209
      %1511 = vmatpush1.msra.mxu0 %v1208
      %1512 = vmatprep.subr.mxu0 %v1206
      %1513 = vmatpush1.msra.mxu0 %v1205
      %1514 = vmatprep.subr.mxu0 %v1203
      %1515 = vmatpush1.msra.mxu0 %v1202
      %1516 = vmatprep.subr.mxu0 %v1200
      %1517 = vmatpush1.msra.mxu0 %v1199
      %1518 = vmatprep.subr.mxu0 %v1197
      %1519 = vmatpush1.msra.mxu0 %v1196
      %1520 = vmatprep.subr.mxu0 %v1194
      %1521 = vmatpush1.msra.mxu0 %v1193
      %1522 = vmatprep.subr.mxu0 %v1191
      %1523 = vmatpush1.msra.mxu0 %v1190
      %1524 = vmatprep.subr.mxu0 %v1188
      %1525 = vmatpush1.msra.mxu0 %v1187
      %1526 = vmatprep.subr.mxu0 %v1185
      %1527 = vmatpush1.msra.mxu0 %v1184
      %1528 = vmatprep.subr.mxu0 %v1182
      %1529 = vmatpush1.msra.mxu0 %v1181
      %1530 = vmatprep.subr.mxu0 %v1179
      %1531 = vmatpush1.msra.mxu0 %v1178
      %1532 = vmatprep.subr.mxu0 %v1176
      %1533 = vmatpush1.msra.mxu0 %v1175
      %1534 = vmatprep.subr.mxu0 %v1173
      %1535 = vmatpush1.msra.mxu0 %v1172
      %1536 = vmatprep.subr.mxu0 %v1170
      %1537 = vmatpush1.msra.mxu0 %v1169
      %1538 = vmatprep.subr.mxu0 %v1263
      %1539 = vmatpush2.msra.mxu0 %v1262
      %1540 = vmatprep.subr.mxu0 %v1260
      %1541 = vmatpush2.msra.mxu0 %v1259
      %1542 = vmatprep.subr.mxu0 %v1257
      %1543 = vmatpush2.msra.mxu0 %v1256
      %1544 = vmatprep.subr.mxu0 %v1254
      %1545 = vmatpush2.msra.mxu0 %v1253
      %1546 = vmatprep.subr.mxu0 %v1251
      %1547 = vmatpush2.msra.mxu0 %v1250
      %1548 = vmatprep.subr.mxu0 %v1248
      %1549 = vmatpush2.msra.mxu0 %v1247
      %1550 = vmatprep.subr.mxu0 %v1245
      %1551 = vmatpush2.msra.mxu0 %v1244
      %1552 = vmatprep.subr.mxu0 %v1242
      %1553 = vmatpush2.msra.mxu0 %v1241
      %1554 = vmatprep.subr.mxu0 %v1239
      %1555 = vmatpush2.msra.mxu0 %v1238
      %1556 = vmatprep.subr.mxu0 %v1236
      %1557 = vmatpush2.msra.mxu0 %v1235
      %1558 = vmatprep.subr.mxu0 %v1233
      %1559 = vmatpush2.msra.mxu0 %v1232
      %1560 = vmatprep.subr.mxu0 %v1230
      %1561 = vmatpush2.msra.mxu0 %v1229
      %1562 = vmatprep.subr.mxu0 %v1227
      %1563 = vmatpush2.msra.mxu0 %v1226
      %1564 = vmatprep.subr.mxu0 %v1224
      %1565 = vmatpush2.msra.mxu0 %v1223
      %1566 = vmatprep.subr.mxu0 %v1221
      %1567 = vmatpush2.msra.mxu0 %v1220
      %1568 = vmatprep.subr.mxu0 %v1218
      %1569 = vmatpush2.msra.mxu0 %v1217
      %1570 = vmatprep.mubr.f32.mxu0 %v62
      %1571 = vmatmul.mubr.f32.gmra.mxu0 %v61
      %v1572 = vpop.f32.mrf.mxu0
      %v1573 = vadd.f32 %v1502, %v1572
      %v1574 = vpop.f32.mrf.mxu0
      %v1575 = vadd.f32 %v1504, %v1574
      %1576 = vdwg.mxu0
      %1577 = vmatprep.subr.mxu0 %v1311
      %1578 = vmatpush1.msra.mxu0 %v1310
      %1579 = vmatprep.subr.mxu0 %v1308
      %1580 = vmatpush1.msra.mxu0 %v1307
      %1581 = vmatprep.subr.mxu0 %v1305
      %1582 = vmatpush1.msra.mxu0 %v1304
      %1583 = vmatprep.subr.mxu0 %v1302
      %1584 = vmatpush1.msra.mxu0 %v1301
      %1585 = vmatprep.subr.mxu0 %v1299
      %1586 = vmatpush1.msra.mxu0 %v1298
      %1587 = vmatprep.subr.mxu0 %v1296
      %1588 = vmatpush1.msra.mxu0 %v1295
      %1589 = vmatprep.subr.mxu0 %v1293
      %1590 = vmatpush1.msra.mxu0 %v1292
      %1591 = vmatprep.subr.mxu0 %v1290
      %1592 = vmatpush1.msra.mxu0 %v1289
      %1593 = vmatprep.subr.mxu0 %v1287
      %1594 = vmatpush1.msra.mxu0 %v1286
      %1595 = vmatprep.subr.mxu0 %v1284
      %1596 = vmatpush1.msra.mxu0 %v1283
      %1597 = vmatprep.subr.mxu0 %v1281
      %1598 = vmatpush1.msra.mxu0 %v1280
      %1599 = vmatprep.subr.mxu0 %v1278
      %1600 = vmatpush1.msra.mxu0 %v1277
      %1601 = vmatprep.subr.mxu0 %v1275
      %1602 = vmatpush1.msra.mxu0 %v1274
      %1603 = vmatprep.subr.mxu0 %v1272
      %1604 = vmatpush1.msra.mxu0 %v1271
      %1605 = vmatprep.subr.mxu0 %v1269
      %1606 = vmatpush1.msra.mxu0 %v1268
      %1607 = vmatprep.subr.mxu0 %v1266
      %1608 = vmatpush1.msra.mxu0 %v1265
      %1609 = vmatprep.subr.mxu0 %v1359
      %1610 = vmatpush2.msra.mxu0 %v1358
      %1611 = vmatprep.subr.mxu0 %v1356
      %1612 = vmatpush2.msra.mxu0 %v1355
      %1613 = vmatprep.subr.mxu0 %v1353
      %1614 = vmatpush2.msra.mxu0 %v1352
      %1615 = vmatprep.subr.mxu0 %v1350
      %1616 = vmatpush2.msra.mxu0 %v1349
      %1617 = vmatprep.subr.mxu0 %v1347
      %1618 = vmatpush2.msra.mxu0 %v1346
      %1619 = vmatprep.subr.mxu0 %v1344
      %1620 = vmatpush2.msra.mxu0 %v1343
      %1621 = vmatprep.subr.mxu0 %v1341
      %1622 = vmatpush2.msra.mxu0 %v1340
      %1623 = vmatprep.subr.mxu0 %v1338
      %1624 = vmatpush2.msra.mxu0 %v1337
      %1625 = vmatprep.subr.mxu0 %v1335
      %1626 = vmatpush2.msra.mxu0 %v1334
      %1627 = vmatprep.subr.mxu0 %v1332
      %1628 = vmatpush2.msra.mxu0 %v1331
      %1629 = vmatprep.subr.mxu0 %v1329
      %1630 = vmatpush2.msra.mxu0 %v1328
      %1631 = vmatprep.subr.mxu0 %v1326
      %1632 = vmatpush2.msra.mxu0 %v1325
      %1633 = vmatprep.subr.mxu0 %v1323
      %1634 = vmatpush2.msra.mxu0 %v1322
      %1635 = vmatprep.subr.mxu0 %v1320
      %1636 = vmatpush2.msra.mxu0 %v1319
      %1637 = vmatprep.subr.mxu0 %v1317
      %1638 = vmatpush2.msra.mxu0 %v1316
      %1639 = vmatprep.subr.mxu0 %v1314
      %1640 = vmatpush2.msra.mxu0 %v1313
      %1641 = vmatprep.mubr.f32.mxu0 %v64
      %1642 = vmatmul.mubr.f32.gmra.mxu0 %v63
      %v1643 = vpop.f32.mrf.mxu0
      %v1644 = vadd.f32 %v1573, %v1643
      %v1645 = vpop.f32.mrf.mxu0
      %v1646 = vadd.f32 %v1575, %v1645
      %1647 = vdwg.mxu0
      %1648 = vmatprep.subr.mxu0 0.0
      %1649 = vmatpush1.msra.mxu0 %v1024
      %1650 = vmatprep.subr.mxu0 0.0
      %1651 = vmatpush1.msra.mxu0 %v1021
      %1652 = vmatprep.subr.mxu0 0.0
      %1653 = vmatpush1.msra.mxu0 %v1018
      %1654 = vmatprep.subr.mxu0 0.0
      %1655 = vmatpush1.msra.mxu0 %v1015
      %1656 = vmatprep.subr.mxu0 0.0
      %1657 = vmatpush1.msra.mxu0 %v1012
      %1658 = vmatprep.subr.mxu0 0.0
      %1659 = vmatpush1.msra.mxu0 %v1009
      %1660 = vmatprep.subr.mxu0 0.0
      %1661 = vmatpush1.msra.mxu0 %v1006
      %1662 = vmatprep.subr.mxu0 0.0
      %1663 = vmatpush1.msra.mxu0 %v1003
      %1664 = vmatprep.subr.mxu0 0.0
      %1665 = vmatpush1.msra.mxu0 %v1000
      %1666 = vmatprep.subr.mxu0 0.0
      %1667 = vmatpush1.msra.mxu0 %v997
      %1668 = vmatprep.subr.mxu0 0.0
      %1669 = vmatpush1.msra.mxu0 %v994
      %1670 = vmatprep.subr.mxu0 0.0
      %1671 = vmatpush1.msra.mxu0 %v991
      %1672 = vmatprep.subr.mxu0 0.0
      %1673 = vmatpush1.msra.mxu0 %v988
      %1674 = vmatprep.subr.mxu0 0.0
      %1675 = vmatpush1.msra.mxu0 %v985
      %1676 = vmatprep.subr.mxu0 0.0
      %1677 = vmatpush1.msra.mxu0 %v982
      %1678 = vmatprep.subr.mxu0 0.0
      %1679 = vmatpush1.msra.mxu0 %v979
      %1680 = vmatprep.subr.mxu0 0.0
      %1681 = vmatpush2.msra.mxu0 %v1072
      %1682 = vmatprep.subr.mxu0 0.0
      %1683 = vmatpush2.msra.mxu0 %v1069
      %1684 = vmatprep.subr.mxu0 0.0
      %1685 = vmatpush2.msra.mxu0 %v1066
      %1686 = vmatprep.subr.mxu0 0.0
      %1687 = vmatpush2.msra.mxu0 %v1063
      %1688 = vmatprep.subr.mxu0 0.0
      %1689 = vmatpush2.msra.mxu0 %v1060
      %1690 = vmatprep.subr.mxu0 0.0
      %1691 = vmatpush2.msra.mxu0 %v1057
      %1692 = vmatprep.subr.mxu0 0.0
      %1693 = vmatpush2.msra.mxu0 %v1054
      %1694 = vmatprep.subr.mxu0 0.0
      %1695 = vmatpush2.msra.mxu0 %v1051
      %1696 = vmatprep.subr.mxu0 0.0
      %1697 = vmatpush2.msra.mxu0 %v1048
      %1698 = vmatprep.subr.mxu0 0.0
      %1699 = vmatpush2.msra.mxu0 %v1045
      %1700 = vmatprep.subr.mxu0 0.0
      %1701 = vmatpush2.msra.mxu0 %v1042
      %1702 = vmatprep.subr.mxu0 0.0
      %1703 = vmatpush2.msra.mxu0 %v1039
      %1704 = vmatprep.subr.mxu0 0.0
      %1705 = vmatpush2.msra.mxu0 %v1036
      %1706 = vmatprep.subr.mxu0 0.0
      %1707 = vmatpush2.msra.mxu0 %v1033
      %1708 = vmatprep.subr.mxu0 0.0
      %1709 = vmatpush2.msra.mxu0 %v1030
      %1710 = vmatprep.subr.mxu0 0.0
      %1711 = vmatpush2.msra.mxu0 %v1027
      %1712 = vmatprep.mubr.f32.mxu0 %v58
      %1713 = vmatmul.mubr.f32.gmra.mxu0 %v57
      %v1714 = vpop.f32.mrf.mxu0
      %v1715 = vadd.f32 0.0, %v1714
      %v1716 = vpop.f32.mrf.mxu0
      %1717 = vdwg.mxu0
      %1718 = vmatprep.subr.mxu0 0.0
      %1719 = vmatpush1.msra.mxu0 %v1120
      %1720 = vmatprep.subr.mxu0 0.0
      %1721 = vmatpush1.msra.mxu0 %v1117
      %1722 = vmatprep.subr.mxu0 0.0
      %1723 = vmatpush1.msra.mxu0 %v1114
      %1724 = vmatprep.subr.mxu0 0.0
      %1725 = vmatpush1.msra.mxu0 %v1111
      %1726 = vmatprep.subr.mxu0 0.0
      %1727 = vmatpush1.msra.mxu0 %v1108
      %1728 = vmatprep.subr.mxu0 0.0
      %1729 = vmatpush1.msra.mxu0 %v1105
      %1730 = vmatprep.subr.mxu0 0.0
      %1731 = vmatpush1.msra.mxu0 %v1102
      %1732 = vmatprep.subr.mxu0 0.0
      %1733 = vmatpush1.msra.mxu0 %v1099
      %1734 = vmatprep.subr.mxu0 0.0
      %1735 = vmatpush1.msra.mxu0 %v1096
      %1736 = vmatprep.subr.mxu0 0.0
      %1737 = vmatpush1.msra.mxu0 %v1093
      %1738 = vmatprep.subr.mxu0 0.0
      %1739 = vmatpush1.msra.mxu0 %v1090
      %1740 = vmatprep.subr.mxu0 0.0
      %1741 = vmatpush1.msra.mxu0 %v1087
      %1742 = vmatprep.subr.mxu0 0.0
      %1743 = vmatpush1.msra.mxu0 %v1084
      %1744 = vmatprep.subr.mxu0 0.0
      %1745 = vmatpush1.msra.mxu0 %v1081
      %1746 = vmatprep.subr.mxu0 0.0
      %1747 = vmatpush1.msra.mxu0 %v1078
      %1748 = vmatprep.subr.mxu0 0.0
      %1749 = vmatpush1.msra.mxu0 %v1075
      %1750 = vmatprep.subr.mxu0 0.0
      %1751 = vmatpush2.msra.mxu0 %v1168
      %1752 = vmatprep.subr.mxu0 0.0
      %1753 = vmatpush2.msra.mxu0 %v1165
      %1754 = vmatprep.subr.mxu0 0.0
      %1755 = vmatpush2.msra.mxu0 %v1162
      %1756 = vmatprep.subr.mxu0 0.0
      %1757 = vmatpush2.msra.mxu0 %v1159
      %1758 = vmatprep.subr.mxu0 0.0
      %1759 = vmatpush2.msra.mxu0 %v1156
      %1760 = vmatprep.subr.mxu0 0.0
      %1761 = vmatpush2.msra.mxu0 %v1153
      %1762 = vmatprep.subr.mxu0 0.0
      %1763 = vmatpush2.msra.mxu0 %v1150
      %1764 = vmatprep.subr.mxu0 0.0
      %1765 = vmatpush2.msra.mxu0 %v1147
      %1766 = vmatprep.subr.mxu0 0.0
      %1767 = vmatpush2.msra.mxu0 %v1144
      %1768 = vmatprep.subr.mxu0 0.0
      %1769 = vmatpush2.msra.mxu0 %v1141
      %1770 = vmatprep.subr.mxu0 0.0
      %1771 = vmatpush2.msra.mxu0 %v1138
      %1772 = vmatprep.subr.mxu0 0.0
      %1773 = vmatpush2.msra.mxu0 %v1135
      %1774 = vmatprep.subr.mxu0 0.0
      %1775 = vmatpush2.msra.mxu0 %v1132
      %1776 = vmatprep.subr.mxu0 0.0
      %1777 = vmatpush2.msra.mxu0 %v1129
      %1778 = vmatprep.subr.mxu0 0.0
      %1779 = vmatpush2.msra.mxu0 %v1126
      %1780 = vmatprep.subr.mxu0 0.0
      %1781 = vmatpush2.msra.mxu0 %v1123
      %1782 = vmatprep.mubr.f32.mxu0 %v60
      %1783 = vmatmul.mubr.f32.gmra.mxu0 %v59
      %v1784 = vpop.f32.mrf.mxu0
      %v1785 = vadd.f32 %v1715, %v1784
      %v1786 = vpop.f32.mrf.mxu0
      %1787 = vdwg.mxu0
      %1788 = vmatprep.subr.mxu0 0.0
      %1789 = vmatpush1.msra.mxu0 %v1216
      %1790 = vmatprep.subr.mxu0 0.0
      %1791 = vmatpush1.msra.mxu0 %v1213
      %1792 = vmatprep.subr.mxu0 0.0
      %1793 = vmatpush1.msra.mxu0 %v1210
      %1794 = vmatprep.subr.mxu0 0.0
      %1795 = vmatpush1.msra.mxu0 %v1207
      %1796 = vmatprep.subr.mxu0 0.0
      %1797 = vmatpush1.msra.mxu0 %v1204
      %1798 = vmatprep.subr.mxu0 0.0
      %1799 = vmatpush1.msra.mxu0 %v1201
      %1800 = vmatprep.subr.mxu0 0.0
      %1801 = vmatpush1.msra.mxu0 %v1198
      %1802 = vmatprep.subr.mxu0 0.0
      %1803 = vmatpush1.msra.mxu0 %v1195
      %1804 = vmatprep.subr.mxu0 0.0
      %1805 = vmatpush1.msra.mxu0 %v1192
      %1806 = vmatprep.subr.mxu0 0.0
      %1807 = vmatpush1.msra.mxu0 %v1189
      %1808 = vmatprep.subr.mxu0 0.0
      %1809 = vmatpush1.msra.mxu0 %v1186
      %1810 = vmatprep.subr.mxu0 0.0
      %1811 = vmatpush1.msra.mxu0 %v1183
      %1812 = vmatprep.subr.mxu0 0.0
      %1813 = vmatpush1.msra.mxu0 %v1180
      %1814 = vmatprep.subr.mxu0 0.0
      %1815 = vmatpush1.msra.mxu0 %v1177
      %1816 = vmatprep.subr.mxu0 0.0
      %1817 = vmatpush1.msra.mxu0 %v1174
      %1818 = vmatprep.subr.mxu0 0.0
      %1819 = vmatpush1.msra.mxu0 %v1171
      %1820 = vmatprep.subr.mxu0 0.0
      %1821 = vmatpush2.msra.mxu0 %v1264
      %1822 = vmatprep.subr.mxu0 0.0
      %1823 = vmatpush2.msra.mxu0 %v1261
      %1824 = vmatprep.subr.mxu0 0.0
      %1825 = vmatpush2.msra.mxu0 %v1258
      %1826 = vmatprep.subr.mxu0 0.0
      %1827 = vmatpush2.msra.mxu0 %v1255
      %1828 = vmatprep.subr.mxu0 0.0
      %1829 = vmatpush2.msra.mxu0 %v1252
      %1830 = vmatprep.subr.mxu0 0.0
      %1831 = vmatpush2.msra.mxu0 %v1249
      %1832 = vmatprep.subr.mxu0 0.0
      %1833 = vmatpush2.msra.mxu0 %v1246
      %1834 = vmatprep.subr.mxu0 0.0
      %1835 = vmatpush2.msra.mxu0 %v1243
      %1836 = vmatprep.subr.mxu0 0.0
      %1837 = vmatpush2.msra.mxu0 %v1240
      %1838 = vmatprep.subr.mxu0 0.0
      %1839 = vmatpush2.msra.mxu0 %v1237
      %1840 = vmatprep.subr.mxu0 0.0
      %1841 = vmatpush2.msra.mxu0 %v1234
      %1842 = vmatprep.subr.mxu0 0.0
      %1843 = vmatpush2.msra.mxu0 %v1231
      %1844 = vmatprep.subr.mxu0 0.0
      %1845 = vmatpush2.msra.mxu0 %v1228
      %1846 = vmatprep.subr.mxu0 0.0
      %1847 = vmatpush2.msra.mxu0 %v1225
      %1848 = vmatprep.subr.mxu0 0.0
      %1849 = vmatpush2.msra.mxu0 %v1222
      %1850 = vmatprep.subr.mxu0 0.0
      %1851 = vmatpush2.msra.mxu0 %v1219
      %1852 = vmatprep.mubr.f32.mxu0 %v62
      %1853 = vmatmul.mubr.f32.gmra.mxu0 %v61
      %v1854 = vpop.f32.mrf.mxu0
      %v1855 = vadd.f32 %v1785, %v1854
      %v1856 = vpop.f32.mrf.mxu0
      %1857 = vdwg.mxu0
      %1858 = vmatprep.subr.mxu0 0.0
      %1859 = vmatpush1.msra.mxu0 %v1312
      %1860 = vmatprep.subr.mxu0 0.0
      %1861 = vmatpush1.msra.mxu0 %v1309
      %1862 = vmatprep.subr.mxu0 0.0
      %1863 = vmatpush1.msra.mxu0 %v1306
      %1864 = vmatprep.subr.mxu0 0.0
      %1865 = vmatpush1.msra.mxu0 %v1303
      %1866 = vmatprep.subr.mxu0 0.0
      %1867 = vmatpush1.msra.mxu0 %v1300
      %1868 = vmatprep.subr.mxu0 0.0
      %1869 = vmatpush1.msra.mxu0 %v1297
      %1870 = vmatprep.subr.mxu0 0.0
      %1871 = vmatpush1.msra.mxu0 %v1294
      %1872 = vmatprep.subr.mxu0 0.0
      %1873 = vmatpush1.msra.mxu0 %v1291
      %1874 = vmatprep.subr.mxu0 0.0
      %1875 = vmatpush1.msra.mxu0 %v1288
      %1876 = vmatprep.subr.mxu0 0.0
      %1877 = vmatpush1.msra.mxu0 %v1285
      %1878 = vmatprep.subr.mxu0 0.0
      %1879 = vmatpush1.msra.mxu0 %v1282
      %1880 = vmatprep.subr.mxu0 0.0
      %1881 = vmatpush1.msra.mxu0 %v1279
      %1882 = vmatprep.subr.mxu0 0.0
      %1883 = vmatpush1.msra.mxu0 %v1276
      %1884 = vmatprep.subr.mxu0 0.0
      %1885 = vmatpush1.msra.mxu0 %v1273
      %1886 = vmatprep.subr.mxu0 0.0
      %1887 = vmatpush1.msra.mxu0 %v1270
      %1888 = vmatprep.subr.mxu0 0.0
      %1889 = vmatpush1.msra.mxu0 %v1267
      %1890 = vmatprep.subr.mxu0 0.0
      %1891 = vmatpush2.msra.mxu0 %v1360
      %1892 = vmatprep.subr.mxu0 0.0
      %1893 = vmatpush2.msra.mxu0 %v1357
      %1894 = vmatprep.subr.mxu0 0.0
      %1895 = vmatpush2.msra.mxu0 %v1354
      %1896 = vmatprep.subr.mxu0 0.0
      %1897 = vmatpush2.msra.mxu0 %v1351
      %1898 = vmatprep.subr.mxu0 0.0
      %1899 = vmatpush2.msra.mxu0 %v1348
      %1900 = vmatprep.subr.mxu0 0.0
      %1901 = vmatpush2.msra.mxu0 %v1345
      %1902 = vmatprep.subr.mxu0 0.0
      %1903 = vmatpush2.msra.mxu0 %v1342
      %1904 = vmatprep.subr.mxu0 0.0
      %1905 = vmatpush2.msra.mxu0 %v1339
      %1906 = vmatprep.subr.mxu0 0.0
      %1907 = vmatpush2.msra.mxu0 %v1336
      %1908 = vmatprep.subr.mxu0 0.0
      %1909 = vmatpush2.msra.mxu0 %v1333
      %1910 = vmatprep.subr.mxu0 0.0
      %1911 = vmatpush2.msra.mxu0 %v1330
      %1912 = vmatprep.subr.mxu0 0.0
      %1913 = vmatpush2.msra.mxu0 %v1327
      %1914 = vmatprep.subr.mxu0 0.0
      %1915 = vmatpush2.msra.mxu0 %v1324
      %1916 = vmatprep.subr.mxu0 0.0
      %1917 = vmatpush2.msra.mxu0 %v1321
      %1918 = vmatprep.subr.mxu0 0.0
      %1919 = vmatpush2.msra.mxu0 %v1318
      %1920 = vmatprep.subr.mxu0 0.0
      %1921 = vmatpush2.msra.mxu0 %v1315
      %1922 = vmatprep.mubr.f32.mxu0 %v64
      %1923 = vmatmul.mubr.f32.gmra.mxu0 %v63
      %v1924 = vpop.f32.mrf.mxu0
      %v1925 = vadd.f32 %v1855, %v1924
      %v1926 = vpop.f32.mrf.mxu0
      %1927 = vdwg.mxu0
      %v1928 = vadd.f32 %v1361, %v1644
      %v1929 = vadd.f32 %v1362, %v1646
      %v1930 = vadd.f32 %v1363, %v1925
      %1931 = vst [vmem:[#allocation2] sm:$0xff] %v1928
      %1932 = vst [vmem:[#allocation2 + $0x8] sm:$0xff] %v1929
      %1933 = vst [vmem:[#allocation2 + $0x10] sm:$0xff] %v1930
    $region21: #{tpu_custom_call.1} parent=1 // pred_fallthru
      _
    // Predicated region
    $region22: #{tpu_custom_call.1} parent=1 // pred_check
      %p1934 = pneg %p40
    $region23: #{tpu_custom_call.1} parent=1 // pred_check_branch
      %1936 = sbr.rel (%p1934) target = $region25
    $region24: #{tpu_custom_call.1} parent=1 // pred_region
      %v1937 = vld [vmem:[#allocation2] sm:$0xff]
      %v1938 = vld [vmem:[#allocation2 + $0x8] sm:$0xff]
      %v1939 = vld [vmem:[#allocation2 + $0x10] sm:$0xff]
      %1940 = vst [vmem:[#allocation9] sm:$0xff] %v1937
      %1941 = vst [vmem:[#allocation9 + $0x8] sm:$0xff] %v1938
      %1942 = vst [vmem:[#allocation9 + $0x10] sm:$0xff] %v1939
    $region25: #{tpu_custom_call.1} parent=1 // pred_fallthru
      _
    // Predicated region
    $region26: #{tpu_custom_call.1} parent=1 // pred_check
      _
    $region27: #{tpu_custom_call.1} parent=1 // pred_check_branch
      %1944 = sbr.rel (0) target = $region29
    $region28: #{tpu_custom_call.1} parent=1 // pred_region
      %s1946 = ssub.s32 384, 384
      %1947 = vsyncadd [#allocation8], %s1946
      %s1949 = sshll.u32 [#allocation9], 4
      %s1950 = int_to_ptr.vmem [resolvable:$true] %s1949
      %1952 = dma.vmem_to_hbm [thread:$0]  %s1950, 384, %s4, [#allocation8]
    $region29: #{tpu_custom_call.1} parent=1 // pred_fallthru
      _
    // Predicated region
    $region30: #{tpu_custom_call.1} parent=1 // pred_check
      _
    $region31: #{tpu_custom_call.1} parent=1 // pred_check_branch
      %1954 = sbr.rel (0) target = $region33
    $region32: #{tpu_custom_call.1} parent=1 // pred_region
      %1955 = dma.done [#allocation8], 384
    $region33: #{tpu_custom_call.1} parent=1 // pred_fallthru
      _
    %1956 = vsyncpa [#allocation7], 1
    %1957 = vsyncpa [#allocation8], 1

</llo_original>
